<compile_context>
chip_gen: v5e
topology: v5e:2x2
jax: 0.10.0
libtpu: 0.0.40
codegen_flags: <defaults>
</compile_context>

<pallas_src>
import functools

import jax
import jax.numpy as jnp
import numpy as np
from jax import lax
from jax.experimental import pallas as pl
from jax.experimental.pallas import tpu as pltpu

EPS = 1e-5
LANE = 128                    # lane width: kernel K / Cout dims are padded to 128 (lane-dense)
TM = 256                      # rows per grid step.  Raise to 512-2048 for production sizes;
                              # re-derive for v7x (64 MiB physical / 32 MiB scoped VMEM).
VMEM_LIMIT = 32 * 1024 * 1024


def _round_up(v, m):
    return ((v + m - 1) // m) * m


def _pad2d(x, rows, cols):
    return jnp.pad(x, ((0, rows - x.shape[0]), (0, cols - x.shape[1])))


# ----------------------------- Pallas kernels -----------------------------

def _mm_bias_kernel(x_ref, w_ref, b_ref, o_ref):
    # o = x @ w + b   (bf16 inputs, f32 MXU accumulation, lane-dense f32 store)
    acc = jnp.dot(x_ref[...], w_ref[...], preferred_element_type=jnp.float32)
    o_ref[...] = acc + b_ref[...]


def _mm_bias_relu_stats_kernel(x_ref, w_ref, b_ref, o_ref, sum_ref, ssq_ref, *, m_real, tm):
    # y = relu(x @ w + b); per-channel sum / sum-of-squares accumulated across the M grid
    # axis (exact train-mode BatchNorm statistics).  M is therefore a reduction axis
    # ("arbitrary"); rows beyond the real M (padding) are masked out of the statistics.
    i = pl.program_id(0)

    @pl.when(i == 0)
    def _init():
        sum_ref[...] = jnp.zeros_like(sum_ref)
        ssq_ref[...] = jnp.zeros_like(ssq_ref)

    acc = jnp.dot(x_ref[...], w_ref[...], preferred_element_type=jnp.float32)
    acc = jnp.maximum(acc + b_ref[...], 0.0)
    o_ref[...] = acc

    row = i * tm + lax.broadcasted_iota(jnp.int32, (tm, 1), 0)
    valid = (row < m_real).astype(jnp.float32)
    accv = acc * valid
    sum_ref[...] += jnp.sum(accv, axis=0, keepdims=True)
    ssq_ref[...] += jnp.sum(accv * accv, axis=0, keepdims=True)


def _affine_kernel(x_ref, a_ref, b_ref, o_ref):
    # Per-channel affine (BatchNorm normalization finalize): o = a * x + b
    o_ref[...] = x_ref[...] * a_ref[...] + b_ref[...]


# ----------------------------- pallas_call wrappers -----------------------------

def _io_specs(tm, kp):
    return [pl.BlockSpec((tm, kp), lambda i: (i, 0)),      # activations: tiled over M
            pl.BlockSpec((kp, LANE), lambda i: (0, 0)),    # weights: replicated block
            pl.BlockSpec((1, LANE), lambda i: (0, 0))]     # bias: replicated block


def _prep_operands(patches, wmat, bias, tm):
    m, k = patches.shape
    cout = wmat.shape[1]                                   # assumes cout <= 128 (true here)
    kp = _round_up(k, LANE)
    mp = _round_up(m, tm)
    x = _pad2d(patches, mp, kp).astype(jnp.bfloat16)       # bf16 MXU inputs
    w = _pad2d(wmat, kp, LANE).astype(jnp.bfloat16)
    b = jnp.pad(bias, (0, LANE - cout)).reshape(1, LANE).astype(jnp.float32)
    return x, w, b, m, mp, kp, cout


def matmul_bias(patches, wmat, bias, tm=TM):
    """(M, K) @ (K, Cout) + bias, tiled over M.  Returns (M, Cout) f32."""
    x, w, b, m, mp, kp, cout = _prep_operands(patches, wmat, bias, tm)
    out = pl.pallas_call(
        _mm_bias_kernel,
        out_shape=jax.ShapeDtypeStruct((mp, LANE), jnp.float32),
        grid=(mp // tm,),
        in_specs=_io_specs(tm, kp),
        out_specs=pl.BlockSpec((tm, LANE), lambda i: (i, 0)),
        compiler_params=pltpu.CompilerParams(
            dimension_semantics=("parallel",), vmem_limit_bytes=VMEM_LIMIT),
        cost_estimate=pl.CostEstimate(
            flops=2 * mp * kp * LANE, transcendentals=0,
            bytes_accessed=mp * kp * 2 + kp * LANE * 2 + mp * LANE * 4),
    )(x, w, b)
    return out[:m, :cout]


def matmul_bias_relu_stats(patches, wmat, bias, tm=TM):
    """relu((M,K)@(K,Cout)+bias) with fused cross-tile sum/sumsq reduction for BatchNorm.

    Returns (y_padded (Mp, 128) f32, sum (128,) f32, sumsq (128,) f32)."""
    x, w, b, m, mp, kp, cout = _prep_operands(patches, wmat, bias, tm)
    kernel = functools.partial(_mm_bias_relu_stats_kernel, m_real=m, tm=tm)
    y, s, ss = pl.pallas_call(
        kernel,
        out_shape=(jax.ShapeDtypeStruct((mp, LANE), jnp.float32),
                   jax.ShapeDtypeStruct((1, LANE), jnp.float32),
                   jax.ShapeDtypeStruct((1, LANE), jnp.float32)),
        grid=(mp // tm,),
        in_specs=_io_specs(tm, kp),
        out_specs=(pl.BlockSpec((tm, LANE), lambda i: (i, 0)),
                   pl.BlockSpec((1, LANE), lambda i: (0, 0)),   # accumulator block: same
                   pl.BlockSpec((1, LANE), lambda i: (0, 0))),  # index every grid step
        compiler_params=pltpu.CompilerParams(
            dimension_semantics=("arbitrary",),  # M is a reduction axis for the BN stats
            vmem_limit_bytes=VMEM_LIMIT),
        cost_estimate=pl.CostEstimate(
            flops=2 * mp * kp * LANE, transcendentals=0,
            bytes_accessed=mp * kp * 2 + kp * LANE * 2 + mp * LANE * 4),
    )(x, w, b)
    return y, s[0], ss[0]


def channel_affine(y_padded, a, b, tm=TM):
    """Per-channel o = a*y + b over the padded (Mp, 128) activation slab."""
    mp, lanes = y_padded.shape
    a2 = jnp.pad(a, (0, lanes - a.shape[0])).reshape(1, lanes).astype(jnp.float32)
    b2 = jnp.pad(b, (0, lanes - b.shape[0])).reshape(1, lanes).astype(jnp.float32)
    return pl.pallas_call(
        _affine_kernel,
        out_shape=jax.ShapeDtypeStruct((mp, lanes), jnp.float32),
        grid=(mp // tm,),
        in_specs=[pl.BlockSpec((tm, lanes), lambda i: (i, 0)),
                  pl.BlockSpec((1, lanes), lambda i: (0, 0)),
                  pl.BlockSpec((1, lanes), lambda i: (0, 0))],
        out_specs=pl.BlockSpec((tm, lanes), lambda i: (i, 0)),
        compiler_params=pltpu.CompilerParams(
            dimension_semantics=("parallel",), vmem_limit_bytes=VMEM_LIMIT),
    )(y_padded, a2, b2)


# ----------------------------- layout / im2col helpers (XLA side) -----------------------------

def _im2col_3x3(x_nhwc):
    n, h, w, c = x_nhwc.shape
    ho, wo = h - 2, w - 2
    cols = [x_nhwc[:, kh:kh + ho, kw:kw + wo, :] for kh in range(3) for kw in range(3)]
    patches = jnp.concatenate(cols, axis=-1)               # (N, Ho, Wo, 9*C), (kh, kw, ci) order
    return patches.reshape(n * ho * wo, 9 * c), (n, ho, wo)


def _conv_w_to_mat(w_oihw):
    # (Cout, Cin, kh, kw) -> (kh*kw*Cin, Cout), matching the (kh, kw, ci) patch order.
    cout, cin, kh, kw = w_oihw.shape
    return jnp.transpose(w_oihw, (2, 3, 1, 0)).reshape(kh * kw * cin, cout)


def _bn_affine_coeffs(s, ss, m, gamma, beta, cout):
    mean = s[:cout] / m
    var = ss[:cout] / m - mean * mean                      # biased variance (train-mode BN)
    inv = lax.rsqrt(var + EPS)
    a = gamma * inv
    return a, beta - mean * a


def conv_transpose3x3_s2(d_nhwc, up_w, up_b, tm=TM):
    """PyTorch ConvTranspose2d(k=3, s=2, p=1, output_padding=1) via the 4-phase (sub-pixel)
    decomposition: one dense (N*H*W, 4*Cin) @ (4*Cin, 4*Cup) matmul, no structural zeros."""
    n, h, w, cin = d_nhwc.shape
    cup = up_w.shape[1]
    # 2x2 tap window of d (taps (0,0),(0,1),(1,0),(1,1)); out-of-range taps are zero.
    dp = jnp.pad(d_nhwc, ((0, 0), (0, 1), (0, 1), (0, 0)))
    taps = [dp[:, ty:ty + h, tx:tx + w, :] for ty in range(2) for tx in range(2)]
    patches = jnp.concatenate(taps, axis=-1).reshape(n * h * w, 4 * cin)
    # forward-equivalent (flipped) kernel: wf[p, q, ci, co] = up_w[ci, co, 2-p, 2-q]
    wf = jnp.transpose(jnp.flip(up_w, axis=(2, 3)), (2, 3, 0, 1))
    zeros = jnp.zeros((cin, cup), up_w.dtype)
    rows = []
    for ty in range(2):                                    # tap row offset
        for tx in range(2):                                # tap col offset
            cols = []
            for r in range(2):                             # output phase row
                for sph in range(2):                       # output phase col
                    if (r == 1 or ty == 0) and (sph == 1 or tx == 0):
                        p = 1 if r == 0 else (0 if ty == 0 else 2)
                        q = 1 if sph == 0 else (0 if tx == 0 else 2)
                        cols.append(wf[p, q])
                    else:
                        cols.append(zeros)
            rows.append(jnp.concatenate(cols, axis=1))     # (Cin, 4*Cup)
    wmat = jnp.concatenate(rows, axis=0)                   # (4*Cin, 4*Cup)
    bias = jnp.tile(up_b, 4)                               # same bias for every phase
    out = matmul_bias(patches, wmat, bias, tm)             # (N*H*W, 4*Cup)
    out = out.reshape(n, h, w, 2, 2, cup)                  # (..., phase_r, phase_s, co)
    return jnp.transpose(out, (0, 1, 3, 2, 4, 5)).reshape(n, 2 * h, 2 * w, cup)


# ----------------------------- forward -----------------------------

def expansive_block_forward(params, e_nchw, d_nchw, tm=TM):
    # NHWC end-to-end inside; one layout transpose at entry and one at exit.
    e = jnp.transpose(e_nchw, (0, 2, 3, 1))
    d = jnp.transpose(d_nchw, (0, 2, 3, 1))

    d_up = conv_transpose3x3_s2(d, params['up_w'], params['up_b'], tm)

    dy = e.shape[1] - d_up.shape[1]
    dx = e.shape[2] - d_up.shape[2]
    e_c = e[:, dy // 2: e.shape[1] - dy // 2, dx // 2: e.shape[2] - dx // 2, :]
    cat = jnp.concatenate([e_c, d_up], axis=-1)            # channel order [e, d] == torch.cat dim=1

    # conv1 -> ReLU (fused) -> BatchNorm1 (stats fused, normalize with the affine kernel)
    cmid = params['c1_w'].shape[0]
    p1, (n1, h1, w1) = _im2col_3x3(cat)
    y1, s1, ss1 = matmul_bias_relu_stats(p1, _conv_w_to_mat(params['c1_w']), params['c1_b'], tm)
    a1, b1 = _bn_affine_coeffs(s1, ss1, p1.shape[0], params['bn1_g'], params['bn1_b'], cmid)
    h = channel_affine(y1, a1, b1, tm)[:p1.shape[0], :cmid].reshape(n1, h1, w1, cmid)

    # conv2 -> ReLU (fused) -> BatchNorm2
    cout = params['c2_w'].shape[0]
    p2, (n2, h2, w2) = _im2col_3x3(h)
    y2, s2, ss2 = matmul_bias_relu_stats(p2, _conv_w_to_mat(params['c2_w']), params['c2_b'], tm)
    a2, b2 = _bn_affine_coeffs(s2, ss2, p2.shape[0], params['bn2_g'], params['bn2_b'], cout)
    out = channel_affine(y2, a2, b2, tm)[:p2.shape[0], :cout].reshape(n2, h2, w2, cout)

    return jnp.transpose(out, (0, 3, 1, 2))                # back to NCHW


# ----------------------------- pure-JAX reference (bf16-matched conv inputs) -----------------------------

def reference_forward(params, e, d):
    bf16, f32 = jnp.bfloat16, jnp.float32

    w_eq = jnp.transpose(jnp.flip(params['up_w'], axis=(2, 3)), (1, 0, 2, 3))
    d_up = lax.conv_general_dilated(
        d.astype(bf16), w_eq.astype(bf16), window_strides=(1, 1), padding=((1, 2), (1, 2)),
        lhs_dilation=(2, 2), dimension_numbers=('NCHW', 'OIHW', 'NCHW'),
        preferred_element_type=f32)
    d_up = d_up + params['up_b'].reshape(1, -1, 1, 1)

    dy = e.shape[2] - d_up.shape[2]
    dx = e.shape[3] - d_up.shape[3]
    e_c = e[:, :, dy // 2: e.shape[2] - dy // 2, dx // 2: e.shape[3] - dx // 2]
    cat = jnp.concatenate([e_c, d_up], axis=1)

    def conv_relu_bn(x, w, b, g, bt):
        y = lax.conv_general_dilated(x.astype(bf16), w.astype(bf16), (1, 1), 'VALID',
                                     dimension_numbers=('NCHW', 'OIHW', 'NCHW'),
                                     preferred_element_type=f32)
        y = jnp.maximum(y + b.reshape(1, -1, 1, 1), 0.0)
        mean = jnp.mean(y, axis=(0, 2, 3), keepdims=True)
        var = jnp.mean(jnp.square(y - mean), axis=(0, 2, 3), keepdims=True)
        return g.reshape(1, -1, 1, 1) * (y - mean) * lax.rsqrt(var + EPS) + bt.reshape(1, -1, 1, 1)

    h = conv_relu_bn(cat, params['c1_w'], params['c1_b'], params['bn1_g'], params['bn1_b'])
    return conv_relu_bn(h, params['c2_w'], params['c2_b'], params['bn2_g'], params['bn2_b'])


# ----------------------------- main -----------------------------

if __name__ == "__main__":
    in_ch, mid_ch, out_ch = 8, 8, 4
    N = 2
    ks = jax.random.split(jax.random.PRNGKey(0), 12)
    params = {
        # ConvTranspose2d weight layout: (in_channels, out_channels, kH, kW)
        'up_w': 0.1 * jax.random.normal(ks[0], (in_ch, in_ch // 2, 3, 3), jnp.float32),
        'up_b': 0.1 * jax.random.normal(ks[1], (in_ch // 2,), jnp.float32),
        # Conv2d weight layout: (out_channels, in_channels, kH, kW)
        'c1_w': 0.1 * jax.random.normal(ks[2], (mid_ch, in_ch, 3, 3), jnp.float32),
        'c1_b': 0.1 * jax.random.normal(ks[3], (mid_ch,), jnp.float32),
        'bn1_g': 1.0 + 0.1 * jax.random.normal(ks[4], (mid_ch,), jnp.float32),
        'bn1_b': 0.1 * jax.random.normal(ks[5], (mid_ch,), jnp.float32),
        'c2_w': 0.1 * jax.random.normal(ks[6], (out_ch, mid_ch, 3, 3), jnp.float32),
        'c2_b': 0.1 * jax.random.normal(ks[7], (out_ch,), jnp.float32),
        'bn2_g': 1.0 + 0.1 * jax.random.normal(ks[8], (out_ch,), jnp.float32),
        'bn2_b': 0.1 * jax.random.normal(ks[9], (out_ch,), jnp.float32),
    }
    # e: skip connection (in_ch//2 channels, larger spatial -> center-cropped)
    # d: decoder feature (in_ch channels) -> upsampled 2x by ConvTranspose2d
    e = jax.random.normal(ks[10], (N, in_ch // 2, 18, 18), jnp.float32)
    d = jax.random.normal(ks[11], (N, in_ch, 8, 8), jnp.float32)

    fwd = jax.jit(expansive_block_forward)
    ref_fn = jax.jit(reference_forward)

    out = jax.block_until_ready(fwd(params, e, d))
    ref = jax.block_until_ready(ref_fn(params, e, d))

    assert out.shape == (N, out_ch, 12, 12), out.shape
    # Reference uses the same bf16 conv inputs / f32 accumulation; agreement is ~1e-3.
    np.testing.assert_allclose(np.asarray(out), np.asarray(ref), rtol=1e-2, atol=1e-2)
    print("KERNEL_OK")
</pallas_src>

<mosaic_0001>
module attributes {stable_mosaic.version = 11 : i64} {
  func.func @_mm_bias_kernel(%arg0: i32, %arg1: memref<256x128xbf16, #tpu.memory_space<vmem>>, %arg2: memref<128x128xbf16, #tpu.memory_space<vmem>>, %arg3: memref<1x128xf32, #tpu.memory_space<vmem>>, %arg4: memref<256x128xf32, #tpu.memory_space<vmem>>) attributes {dimension_semantics = [#tpu.dimension_semantics<parallel>], iteration_bounds = array<i64: 1>, scalar_prefetch = 0 : i64, scratch_operands = 0 : i64, tpu.core_type = #tpu.core_type<tc>, window_params = [{transform_indices = @transform_0, window_bounds = array<i64: 256, 128>}, {pipeline_mode = #tpu.pipeline_mode<synchronous>, transform_indices = @transform_1, window_bounds = array<i64: 128, 128>}, {pipeline_mode = #tpu.pipeline_mode<synchronous>, transform_indices = @transform_2, window_bounds = array<i64: 1, 128>}, {transform_indices = @transform_3, window_bounds = array<i64: 256, 128>}]} {
    %c0 = arith.constant 0 : index
    %c0_0 = arith.constant 0 : index
    %0 = vector.load %arg1[%c0, %c0_0] : memref<256x128xbf16, #tpu.memory_space<vmem>>, vector<256x128xbf16>
    %c0_1 = arith.constant 0 : index
    %c0_2 = arith.constant 0 : index
    %1 = vector.load %arg2[%c0_1, %c0_2] : memref<128x128xbf16, #tpu.memory_space<vmem>>, vector<128x128xbf16>
    %cst = arith.constant dense<0.000000e+00> : vector<256x128xf32>
    %2 = tpu.matmul %0, %1, %cst {dimension_numbers = #tpu.dot_dimension_numbers<[1], [0], [0], [1], [0, 0, 1, 1], [], []>} : vector<256x128xbf16>, vector<128x128xbf16>, vector<256x128xf32> -> vector<256x128xf32>
    %c0_3 = arith.constant 0 : index
    %c0_4 = arith.constant 0 : index
    %3 = vector.load %arg3[%c0_3, %c0_4] : memref<1x128xf32, #tpu.memory_space<vmem>>, vector<1x128xf32>
    %4 = vector.broadcast %3 : vector<1x128xf32> to vector<256x128xf32>
    %5 = arith.addf %2, %4 : vector<256x128xf32>
    %c0_5 = arith.constant 0 : index
    %c0_6 = arith.constant 0 : index
    %6 = vector.load %arg4[%c0_5, %c0_6] : memref<256x128xf32, #tpu.memory_space<vmem>>, vector<256x128xf32>
    tpu.vector_store %arg4[%c0_5, %c0_6], %5 {strides = array<i32>} : memref<256x128xf32, #tpu.memory_space<vmem>>, vector<256x128xf32>,
    return
  }
  func.func @transform_0(%arg0: i32) -> (i32, i32) {
    %c0_i32 = arith.constant 0 : i32
    %c0_i32_0 = arith.constant 0 : i32
    return %arg0, %c0_i32 : i32, i32
  }
  func.func @transform_1(%arg0: i32) -> (i32, i32) {
    %c0_i32 = arith.constant 0 : i32
    %c0_i32_0 = arith.constant 0 : i32
    %c0_i32_1 = arith.constant 0 : i32
    return %c0_i32, %c0_i32_0 : i32, i32
  }
  func.func @transform_2(%arg0: i32) -> (i32, i32) {
    %c0_i32 = arith.constant 0 : i32
    %c0_i32_0 = arith.constant 0 : i32
    %c0_i32_1 = arith.constant 0 : i32
    return %c0_i32, %c0_i32_0 : i32, i32
  }
  func.func @transform_3(%arg0: i32) -> (i32, i32) {
    %c0_i32 = arith.constant 0 : i32
    %c0_i32_0 = arith.constant 0 : i32
    return %arg0, %c0_i32 : i32, i32
  }
}

module attributes {stable_mosaic.version = 11 : i64} {
  func.func @_mm_bias_relu_stats_kernel(%arg0: i32, %arg1: memref<256x128xbf16, #tpu.memory_space<vmem>>, %arg2: memref<128x128xbf16, #tpu.memory_space<vmem>>, %arg3: memref<1x128xf32, #tpu.memory_space<vmem>>, %arg4: memref<256x128xf32, #tpu.memory_space<vmem>>, %arg5: memref<1x128xf32, #tpu.memory_space<vmem>>, %arg6: memref<1x128xf32, #tpu.memory_space<vmem>>) attributes {dimension_semantics = [#tpu.dimension_semantics<arbitrary>], iteration_bounds = array<i64: 2>, scalar_prefetch = 0 : i64, scratch_operands = 0 : i64, tpu.core_type = #tpu.core_type<tc>, window_params = [{transform_indices = @transform_0, window_bounds = array<i64: 256, 128>}, {pipeline_mode = #tpu.pipeline_mode<synchronous>, transform_indices = @transform_1, window_bounds = array<i64: 128, 128>}, {pipeline_mode = #tpu.pipeline_mode<synchronous>, transform_indices = @transform_2, window_bounds = array<i64: 1, 128>}, {transform_indices = @transform_3, window_bounds = array<i64: 256, 128>}, {pipeline_mode = #tpu.pipeline_mode<synchronous>, transform_indices = @transform_4, window_bounds = array<i64: 1, 128>}, {pipeline_mode = #tpu.pipeline_mode<synchronous>, transform_indices = @transform_5, window_bounds = array<i64: 1, 128>}]} {
    %c0_i32 = arith.constant 0 : i32
    %0 = arith.cmpi eq, %arg0, %c0_i32 : i32
    %1 = arith.extui %0 : i1 to i32
    %c0_i32_0 = arith.constant 0 : i32
    %2 = arith.cmpi ne, %1, %c0_i32_0 : i32
    scf.if %2 {
      %cst_19 = arith.constant 0.000000e+00 : f32
      %33 = vector.broadcast %cst_19 : f32 to vector<1x128xf32>
      %c0_20 = arith.constant 0 : index
      %c0_21 = arith.constant 0 : index
      %34 = vector.load %arg5[%c0_20, %c0_21] : memref<1x128xf32, #tpu.memory_space<vmem>>, vector<1x128xf32>
      tpu.vector_store %arg5[%c0_20, %c0_21], %33 {strides = array<i32>} : memref<1x128xf32, #tpu.memory_space<vmem>>, vector<1x128xf32>,
      %cst_22 = arith.constant 0.000000e+00 : f32
      %35 = vector.broadcast %cst_22 : f32 to vector<1x128xf32>
      %c0_23 = arith.constant 0 : index
      %c0_24 = arith.constant 0 : index
      %36 = vector.load %arg6[%c0_23, %c0_24] : memref<1x128xf32, #tpu.memory_space<vmem>>, vector<1x128xf32>
      tpu.vector_store %arg6[%c0_23, %c0_24], %35 {strides = array<i32>} : memref<1x128xf32, #tpu.memory_space<vmem>>, vector<1x128xf32>,
    } else {
    }
    %c0 = arith.constant 0 : index
    %c0_1 = arith.constant 0 : index
    %3 = vector.load %arg1[%c0, %c0_1] : memref<256x128xbf16, #tpu.memory_space<vmem>>, vector<256x128xbf16>
    %c0_2 = arith.constant 0 : index
    %c0_3 = arith.constant 0 : index
    %4 = vector.load %arg2[%c0_2, %c0_3] : memref<128x128xbf16, #tpu.memory_space<vmem>>, vector<128x128xbf16>
    %cst = arith.constant dense<0.000000e+00> : vector<256x128xf32>
    %5 = tpu.matmul %3, %4, %cst {dimension_numbers = #tpu.dot_dimension_numbers<[1], [0], [0], [1], [0, 0, 1, 1], [], []>} : vector<256x128xbf16>, vector<128x128xbf16>, vector<256x128xf32> -> vector<256x128xf32>
    %c0_4 = arith.constant 0 : index
    %c0_5 = arith.constant 0 : index
    %6 = vector.load %arg3[%c0_4, %c0_5] : memref<1x128xf32, #tpu.memory_space<vmem>>, vector<1x128xf32>
    %7 = vector.broadcast %6 : vector<1x128xf32> to vector<256x128xf32>
    %8 = arith.addf %5, %7 : vector<256x128xf32>
    %cst_6 = arith.constant 0.000000e+00 : f32
    %9 = vector.broadcast %cst_6 : f32 to vector<256x128xf32>
    %10 = arith.maximumf %8, %9 : vector<256x128xf32>
    %c0_7 = arith.constant 0 : index
    %c0_8 = arith.constant 0 : index
    %11 = vector.load %arg4[%c0_7, %c0_8] : memref<256x128xf32, #tpu.memory_space<vmem>>, vector<256x128xf32>
    tpu.vector_store %arg4[%c0_7, %c0_8], %10 {strides = array<i32>} : memref<256x128xf32, #tpu.memory_space<vmem>>, vector<256x128xf32>,
    %c256_i32 = arith.constant 256 : i32
    %12 = arith.muli %arg0, %c256_i32 : i32
    %13 = tpu.iota {dimensions = array<i32: 0>} : vector<256x1xi32>
    %14 = vector.broadcast %12 : i32 to vector<256x1xi32>
    %15 = arith.addi %14, %13 : vector<256x1xi32>
    %c392_i32 = arith.constant 392 : i32
    %16 = vector.broadcast %c392_i32 : i32 to vector<256x1xi32>
    %17 = arith.cmpi slt, %15, %16 : vector<256x1xi32>
    %18 = arith.extui %17 : vector<256x1xi1> to vector<256x1xi32>
    %19 = arith.sitofp %18 : vector<256x1xi32> to vector<256x1xf32>
    %20 = vector.broadcast %19 : vector<256x1xf32> to vector<256x128xf32>
    %21 = arith.mulf %10, %20 : vector<256x128xf32>
    %c0_9 = arith.constant 0 : index
    %c0_10 = arith.constant 0 : index
    %22 = vector.load %arg5[%c0_9, %c0_10] : memref<1x128xf32, #tpu.memory_space<vmem>>, vector<1x128xf32>
    %cst_11 = arith.constant dense<0.000000e+00> : vector<128xf32>
    %23 = vector.multi_reduction <add>, %21, %cst_11 [0] : vector<256x128xf32> to vector<128xf32>
    %24 = vector.shape_cast %23 : vector<128xf32> to vector<1x128xf32>
    %25 = arith.addf %22, %24 : vector<1x128xf32>
    %c0_12 = arith.constant 0 : index
    %c0_13 = arith.constant 0 : index
    %26 = vector.load %arg5[%c0_12, %c0_13] : memref<1x128xf32, #tpu.memory_space<vmem>>, vector<1x128xf32>
    tpu.vector_store %arg5[%c0_12, %c0_13], %25 {strides = array<i32>} : memref<1x128xf32, #tpu.memory_space<vmem>>, vector<1x128xf32>,
    %c0_14 = arith.constant 0 : index
    %c0_15 = arith.constant 0 : index
    %27 = vector.load %arg6[%c0_14, %c0_15] : memref<1x128xf32, #tpu.memory_space<vmem>>, vector<1x128xf32>
    %28 = arith.mulf %21, %21 : vector<256x128xf32>
    %cst_16 = arith.constant dense<0.000000e+00> : vector<128xf32>
    %29 = vector.multi_reduction <add>, %28, %cst_16 [0] : vector<256x128xf32> to vector<128xf32>
    %30 = vector.shape_cast %29 : vector<128xf32> to vector<1x128xf32>
    %31 = arith.addf %27, %30 : vector<1x128xf32>
    %c0_17 = arith.constant 0 : index
    %c0_18 = arith.constant 0 : index
    %32 = vector.load %arg6[%c0_17, %c0_18] : memref<1x128xf32, #tpu.memory_space<vmem>>, vector<1x128xf32>
    tpu.vector_store %arg6[%c0_17, %c0_18], %31 {strides = array<i32>} : memref<1x128xf32, #tpu.memory_space<vmem>>, vector<1x128xf32>,
    return
  }
  func.func @transform_0(%arg0: i32) -> (i32, i32) {
    %c0_i32 = arith.constant 0 : i32
    %c0_i32_0 = arith.constant 0 : i32
    return %arg0, %c0_i32 : i32, i32
  }
  func.func @transform_1(%arg0: i32) -> (i32, i32) {
    %c0_i32 = arith.constant 0 : i32
    %c0_i32_0 = arith.constant 0 : i32
    %c0_i32_1 = arith.constant 0 : i32
    return %c0_i32, %c0_i32_0 : i32, i32
  }
  func.func @transform_2(%arg0: i32) -> (i32, i32) {
    %c0_i32 = arith.constant 0 : i32
    %c0_i32_0 = arith.constant 0 : i32
    %c0_i32_1 = arith.constant 0 : i32
    return %c0_i32, %c0_i32_0 : i32, i32
  }
  func.func @transform_3(%arg0: i32) -> (i32, i32) {
    %c0_i32 = arith.constant 0 : i32
    %c0_i32_0 = arith.constant 0 : i32
    return %arg0, %c0_i32 : i32, i32
  }
  func.func @transform_4(%arg0: i32) -> (i32, i32) {
    %c0_i32 = arith.constant 0 : i32
    %c0_i32_0 = arith.constant 0 : i32
    %c0_i32_1 = arith.constant 0 : i32
    return %c0_i32, %c0_i32_0 : i32, i32
  }
  func.func @transform_5(%arg0: i32) -> (i32, i32) {
    %c0_i32 = arith.constant 0 : i32
    %c0_i32_0 = arith.constant 0 : i32
    %c0_i32_1 = arith.constant 0 : i32
    return %c0_i32, %c0_i32_0 : i32, i32
  }
}

module attributes {stable_mosaic.version = 11 : i64} {
  func.func @_affine_kernel(%arg0: i32, %arg1: memref<256x128xf32, #tpu.memory_space<vmem>>, %arg2: memref<1x128xf32, #tpu.memory_space<vmem>>, %arg3: memref<1x128xf32, #tpu.memory_space<vmem>>, %arg4: memref<256x128xf32, #tpu.memory_space<vmem>>) attributes {dimension_semantics = [#tpu.dimension_semantics<parallel>], iteration_bounds = array<i64: 2>, scalar_prefetch = 0 : i64, scratch_operands = 0 : i64, tpu.core_type = #tpu.core_type<tc>, window_params = [{transform_indices = @transform_0, window_bounds = array<i64: 256, 128>}, {pipeline_mode = #tpu.pipeline_mode<synchronous>, transform_indices = @transform_1, window_bounds = array<i64: 1, 128>}, {pipeline_mode = #tpu.pipeline_mode<synchronous>, transform_indices = @transform_2, window_bounds = array<i64: 1, 128>}, {transform_indices = @transform_3, window_bounds = array<i64: 256, 128>}]} {
    %c0 = arith.constant 0 : index
    %c0_0 = arith.constant 0 : index
    %0 = vector.load %arg1[%c0, %c0_0] : memref<256x128xf32, #tpu.memory_space<vmem>>, vector<256x128xf32>
    %c0_1 = arith.constant 0 : index
    %c0_2 = arith.constant 0 : index
    %1 = vector.load %arg2[%c0_1, %c0_2] : memref<1x128xf32, #tpu.memory_space<vmem>>, vector<1x128xf32>
    %2 = vector.broadcast %1 : vector<1x128xf32> to vector<256x128xf32>
    %3 = arith.mulf %0, %2 : vector<256x128xf32>
    %c0_3 = arith.constant 0 : index
    %c0_4 = arith.constant 0 : index
    %4 = vector.load %arg3[%c0_3, %c0_4] : memref<1x128xf32, #tpu.memory_space<vmem>>, vector<1x128xf32>
    %5 = vector.broadcast %4 : vector<1x128xf32> to vector<256x128xf32>
    %6 = arith.addf %3, %5 : vector<256x128xf32>
    %c0_5 = arith.constant 0 : index
    %c0_6 = arith.constant 0 : index
    %7 = vector.load %arg4[%c0_5, %c0_6] : memref<256x128xf32, #tpu.memory_space<vmem>>, vector<256x128xf32>
    tpu.vector_store %arg4[%c0_5, %c0_6], %6 {strides = array<i32>} : memref<256x128xf32, #tpu.memory_space<vmem>>, vector<256x128xf32>,
    return
  }
  func.func @transform_0(%arg0: i32) -> (i32, i32) {
    %c0_i32 = arith.constant 0 : i32
    %c0_i32_0 = arith.constant 0 : i32
    return %arg0, %c0_i32 : i32, i32
  }
  func.func @transform_1(%arg0: i32) -> (i32, i32) {
    %c0_i32 = arith.constant 0 : i32
    %c0_i32_0 = arith.constant 0 : i32
    %c0_i32_1 = arith.constant 0 : i32
    return %c0_i32, %c0_i32_0 : i32, i32
  }
  func.func @transform_2(%arg0: i32) -> (i32, i32) {
    %c0_i32 = arith.constant 0 : i32
    %c0_i32_0 = arith.constant 0 : i32
    %c0_i32_1 = arith.constant 0 : i32
    return %c0_i32, %c0_i32_0 : i32, i32
  }
  func.func @transform_3(%arg0: i32) -> (i32, i32) {
    %c0_i32 = arith.constant 0 : i32
    %c0_i32_0 = arith.constant 0 : i32
    return %arg0, %c0_i32 : i32, i32
  }
}

module attributes {stable_mosaic.version = 11 : i64} {
  func.func @_mm_bias_relu_stats_kernel(%arg0: i32, %arg1: memref<256x128xbf16, #tpu.memory_space<vmem>>, %arg2: memref<128x128xbf16, #tpu.memory_space<vmem>>, %arg3: memref<1x128xf32, #tpu.memory_space<vmem>>, %arg4: memref<256x128xf32, #tpu.memory_space<vmem>>, %arg5: memref<1x128xf32, #tpu.memory_space<vmem>>, %arg6: memref<1x128xf32, #tpu.memory_space<vmem>>) attributes {dimension_semantics = [#tpu.dimension_semantics<arbitrary>], iteration_bounds = array<i64: 2>, scalar_prefetch = 0 : i64, scratch_operands = 0 : i64, tpu.core_type = #tpu.core_type<tc>, window_params = [{transform_indices = @transform_0, window_bounds = array<i64: 256, 128>}, {pipeline_mode = #tpu.pipeline_mode<synchronous>, transform_indices = @transform_1, window_bounds = array<i64: 128, 128>}, {pipeline_mode = #tpu.pipeline_mode<synchronous>, transform_indices = @transform_2, window_bounds = array<i64: 1, 128>}, {transform_indices = @transform_3, window_bounds = array<i64: 256, 128>}, {pipeline_mode = #tpu.pipeline_mode<synchronous>, transform_indices = @transform_4, window_bounds = array<i64: 1, 128>}, {pipeline_mode = #tpu.pipeline_mode<synchronous>, transform_indices = @transform_5, window_bounds = array<i64: 1, 128>}]} {
    %c0_i32 = arith.constant 0 : i32
    %0 = arith.cmpi eq, %arg0, %c0_i32 : i32
    %1 = arith.extui %0 : i1 to i32
    %c0_i32_0 = arith.constant 0 : i32
    %2 = arith.cmpi ne, %1, %c0_i32_0 : i32
    scf.if %2 {
      %cst_19 = arith.constant 0.000000e+00 : f32
      %33 = vector.broadcast %cst_19 : f32 to vector<1x128xf32>
      %c0_20 = arith.constant 0 : index
      %c0_21 = arith.constant 0 : index
      %34 = vector.load %arg5[%c0_20, %c0_21] : memref<1x128xf32, #tpu.memory_space<vmem>>, vector<1x128xf32>
      tpu.vector_store %arg5[%c0_20, %c0_21], %33 {strides = array<i32>} : memref<1x128xf32, #tpu.memory_space<vmem>>, vector<1x128xf32>,
      %cst_22 = arith.constant 0.000000e+00 : f32
      %35 = vector.broadcast %cst_22 : f32 to vector<1x128xf32>
      %c0_23 = arith.constant 0 : index
      %c0_24 = arith.constant 0 : index
      %36 = vector.load %arg6[%c0_23, %c0_24] : memref<1x128xf32, #tpu.memory_space<vmem>>, vector<1x128xf32>
      tpu.vector_store %arg6[%c0_23, %c0_24], %35 {strides = array<i32>} : memref<1x128xf32, #tpu.memory_space<vmem>>, vector<1x128xf32>,
    } else {
    }
    %c0 = arith.constant 0 : index
    %c0_1 = arith.constant 0 : index
    %3 = vector.load %arg1[%c0, %c0_1] : memref<256x128xbf16, #tpu.memory_space<vmem>>, vector<256x128xbf16>
    %c0_2 = arith.constant 0 : index
    %c0_3 = arith.constant 0 : index
    %4 = vector.load %arg2[%c0_2, %c0_3] : memref<128x128xbf16, #tpu.memory_space<vmem>>, vector<128x128xbf16>
    %cst = arith.constant dense<0.000000e+00> : vector<256x128xf32>
    %5 = tpu.matmul %3, %4, %cst {dimension_numbers = #tpu.dot_dimension_numbers<[1], [0], [0], [1], [0, 0, 1, 1], [], []>} : vector<256x128xbf16>, vector<128x128xbf16>, vector<256x128xf32> -> vector<256x128xf32>
    %c0_4 = arith.constant 0 : index
    %c0_5 = arith.constant 0 : index
    %6 = vector.load %arg3[%c0_4, %c0_5] : memref<1x128xf32, #tpu.memory_space<vmem>>, vector<1x128xf32>
    %7 = vector.broadcast %6 : vector<1x128xf32> to vector<256x128xf32>
    %8 = arith.addf %5, %7 : vector<256x128xf32>
    %cst_6 = arith.constant 0.000000e+00 : f32
    %9 = vector.broadcast %cst_6 : f32 to vector<256x128xf32>
    %10 = arith.maximumf %8, %9 : vector<256x128xf32>
    %c0_7 = arith.constant 0 : index
    %c0_8 = arith.constant 0 : index
    %11 = vector.load %arg4[%c0_7, %c0_8] : memref<256x128xf32, #tpu.memory_space<vmem>>, vector<256x128xf32>
    tpu.vector_store %arg4[%c0_7, %c0_8], %10 {strides = array<i32>} : memref<256x128xf32, #tpu.memory_space<vmem>>, vector<256x128xf32>,
    %c256_i32 = arith.constant 256 : i32
    %12 = arith.muli %arg0, %c256_i32 : i32
    %13 = tpu.iota {dimensions = array<i32: 0>} : vector<256x1xi32>
    %14 = vector.broadcast %12 : i32 to vector<256x1xi32>
    %15 = arith.addi %14, %13 : vector<256x1xi32>
    %c288_i32 = arith.constant 288 : i32
    %16 = vector.broadcast %c288_i32 : i32 to vector<256x1xi32>
    %17 = arith.cmpi slt, %15, %16 : vector<256x1xi32>
    %18 = arith.extui %17 : vector<256x1xi1> to vector<256x1xi32>
    %19 = arith.sitofp %18 : vector<256x1xi32> to vector<256x1xf32>
    %20 = vector.broadcast %19 : vector<256x1xf32> to vector<256x128xf32>
    %21 = arith.mulf %10, %20 : vector<256x128xf32>
    %c0_9 = arith.constant 0 : index
    %c0_10 = arith.constant 0 : index
    %22 = vector.load %arg5[%c0_9, %c0_10] : memref<1x128xf32, #tpu.memory_space<vmem>>, vector<1x128xf32>
    %cst_11 = arith.constant dense<0.000000e+00> : vector<128xf32>
    %23 = vector.multi_reduction <add>, %21, %cst_11 [0] : vector<256x128xf32> to vector<128xf32>
    %24 = vector.shape_cast %23 : vector<128xf32> to vector<1x128xf32>
    %25 = arith.addf %22, %24 : vector<1x128xf32>
    %c0_12 = arith.constant 0 : index
    %c0_13 = arith.constant 0 : index
    %26 = vector.load %arg5[%c0_12, %c0_13] : memref<1x128xf32, #tpu.memory_space<vmem>>, vector<1x128xf32>
    tpu.vector_store %arg5[%c0_12, %c0_13], %25 {strides = array<i32>} : memref<1x128xf32, #tpu.memory_space<vmem>>, vector<1x128xf32>,
    %c0_14 = arith.constant 0 : index
    %c0_15 = arith.constant 0 : index
    %27 = vector.load %arg6[%c0_14, %c0_15] : memref<1x128xf32, #tpu.memory_space<vmem>>, vector<1x128xf32>
    %28 = arith.mulf %21, %21 : vector<256x128xf32>
    %cst_16 = arith.constant dense<0.000000e+00> : vector<128xf32>
    %29 = vector.multi_reduction <add>, %28, %cst_16 [0] : vector<256x128xf32> to vector<128xf32>
    %30 = vector.shape_cast %29 : vector<128xf32> to vector<1x128xf32>
    %31 = arith.addf %27, %30 : vector<1x128xf32>
    %c0_17 = arith.constant 0 : index
    %c0_18 = arith.constant 0 : index
    %32 = vector.load %arg6[%c0_17, %c0_18] : memref<1x128xf32, #tpu.memory_space<vmem>>, vector<1x128xf32>
    tpu.vector_store %arg6[%c0_17, %c0_18], %31 {strides = array<i32>} : memref<1x128xf32, #tpu.memory_space<vmem>>, vector<1x128xf32>,
    return
  }
  func.func @transform_0(%arg0: i32) -> (i32, i32) {
    %c0_i32 = arith.constant 0 : i32
    %c0_i32_0 = arith.constant 0 : i32
    return %arg0, %c0_i32 : i32, i32
  }
  func.func @transform_1(%arg0: i32) -> (i32, i32) {
    %c0_i32 = arith.constant 0 : i32
    %c0_i32_0 = arith.constant 0 : i32
    %c0_i32_1 = arith.constant 0 : i32
    return %c0_i32, %c0_i32_0 : i32, i32
  }
  func.func @transform_2(%arg0: i32) -> (i32, i32) {
    %c0_i32 = arith.constant 0 : i32
    %c0_i32_0 = arith.constant 0 : i32
    %c0_i32_1 = arith.constant 0 : i32
    return %c0_i32, %c0_i32_0 : i32, i32
  }
  func.func @transform_3(%arg0: i32) -> (i32, i32) {
    %c0_i32 = arith.constant 0 : i32
    %c0_i32_0 = arith.constant 0 : i32
    return %arg0, %c0_i32 : i32, i32
  }
  func.func @transform_4(%arg0: i32) -> (i32, i32) {
    %c0_i32 = arith.constant 0 : i32
    %c0_i32_0 = arith.constant 0 : i32
    %c0_i32_1 = arith.constant 0 : i32
    return %c0_i32, %c0_i32_0 : i32, i32
  }
  func.func @transform_5(%arg0: i32) -> (i32, i32) {
    %c0_i32 = arith.constant 0 : i32
    %c0_i32_0 = arith.constant 0 : i32
    %c0_i32_1 = arith.constant 0 : i32
    return %c0_i32, %c0_i32_0 : i32, i32
  }
}

</mosaic_0001>

<llo_original>
// kernel: tile.8
$region0: #{tile.8}
  #allocation0 [shape = 's32[1]{0}', space=sflag, size = 0x4, scoped, tag = 'scoped memory for tile.8']
  %s0 = inlined_call_operand.vmem [shape: f32[4], index: 0, kind: input, shape index: {}]
  %s1 = inlined_call_operand.vmem [shape: f32[4,4], index: 1, kind: output, shape index: {}]
  // Predicated region
  $region2: #{tile.8} parent=0 // pred_check
    _
  $region3: #{tile.8} parent=0 // pred_check_branch
    %3 = sbr.rel (0) target = $region5
  $region4: #{tile.8} parent=0 // pred_region
    _
  $region5: #{tile.8} parent=0 // pred_fallthru
    _
  %v4 = vld [vmem:[%s0] ss:$0 sm:$0xff]
  %5 = vst [vmem:[%s1] sm:$0xf] %v4

// kernel: tile.9
$region0: #{tile.9}
  %s0 = inlined_call_operand.vmem [shape: f32[4,4], index: 0, kind: input, shape index: {}]
  %s1 = inlined_call_operand.vmem [shape: f32[16], index: 1, kind: output, shape index: {}]
  $region1: #{tile.9} parent=0
    #allocation0 [shape = 'u8[4096]{0}', space=vmem, size = 0x1000, scoped, tag = 'scoped mem for output reshape']
    #allocation1 [shape = 'u8[4096]{0}', space=vmem, size = 0x1000, scoped, tag = 'scoped mem for input reshape']
    %s3 = ssub.s32 16, 1
    %v4 = vld [vmem:[%s0] sm:%s3]
    %5 = vst [vmem:[#allocation1] sm:%s3] %v4
    %v6 = vld [vmem:[#allocation1] sm:$0x1]
    %vm7 = vcmask 31744
    %8 = vst.msk [vmem:[#allocation0] sm:$0x1] %vm7, %v6
    %s9 = scalar_lea.vmem [#allocation1], 3
    %v10 = vld [vmem:[%s9] sm:$0x1]
    %11 = vrot.lane.b32.xlu0 %v10, 12
    %v12 = vpop.permute.xlu0 %11
    %vm13 = vcmask 130144
    %14 = vst.msk [vmem:[#allocation0] sm:$0x1] %vm13, %v12
    %s15 = scalar_lea.vmem [#allocation1], 2
    %v16 = vld [vmem:[%s15] sm:$0x1]
    %17 = vrot.lane.b32.xlu0 %v16, 8
    %v18 = vpop.permute.xlu0 %17
    %vm19 = vcmask 97344
    %20 = vst.msk [vmem:[#allocation0] sm:$0x1] %vm19, %v18
    %s21 = scalar_lea.vmem [#allocation1], 1
    %v22 = vld [vmem:[%s21] sm:$0x1]
    %23 = vrot.lane.b32.xlu0 %v22, 4
    %v24 = vpop.permute.xlu0 %23
    %vm25 = vcmask 64544
    %26 = vst.msk [vmem:[#allocation0] sm:$0x1] %vm25, %v24
    %s28 = ssub.s32 2, 1
    %v29 = vld [vmem:[#allocation0] sm:%s28]
    %s31 = ssub.s32 2, 1
    %32 = vst [vmem:[%s1] sm:%s31] %v29

// kernel: expansive_block_forward.5
$region0: #{expansive_block_forward.5}
  #allocation0 [shape = 'u32[]', space=smem, size = 0x4, offset = 0x4, fixed_abs, tag = 'smem constant byte address 0x4 - core index']
  #allocation1 [shape = 'u32[72,128]{1,0:T(1,128)}', space=vmem, size = 0x9000, scoped, tag = 'internal scratch']
  %s0 = inlined_call_operand.vmem [shape: bf16[256,128], index: 0, kind: input, shape index: {}]
  %s1 = inlined_call_operand.vmem [shape: bf16[128,128], index: 1, kind: input, shape index: {}]
  %s2 = inlined_call_operand.vmem [shape: f32[1,128], index: 2, kind: input, shape index: {}]
  %s3 = inlined_call_operand.vmem [shape: f32[256,128], index: 3, kind: output, shape index: {}]
  %s4 = sld [smem:[#allocation0]]
  $region22: #{expansive_block_forward.5} parent=0
    _
  %s6 = ssub.s32 1, %s4
  %s7 = scalar_select 0, %s6, %s4
  // Predicated region
  $region2: #{expansive_block_forward.5} parent=0 // pred_check
    _
  $region3: #{expansive_block_forward.5} parent=0 // pred_check_branch
    %9 = sbr.rel (0) target = $region5
  $region4: #{expansive_block_forward.5} parent=0 // pred_region
    _
  $region5: #{expansive_block_forward.5} parent=0 // pred_fallthru
    _
  // Predicated region
  $region6: #{expansive_block_forward.5} parent=0 // pred_check
    _
  $region7: #{expansive_block_forward.5} parent=0 // pred_check_branch
    %11 = sbr.rel (0) target = $region9
  $region8: #{expansive_block_forward.5} parent=0 // pred_region
    _
  $region9: #{expansive_block_forward.5} parent=0 // pred_fallthru
    _
  // Predicated region
  $region10: #{expansive_block_forward.5} parent=0 // pred_check
    _
  $region11: #{expansive_block_forward.5} parent=0 // pred_check_branch
    %13 = sbr.rel (0) target = $region13
  $region12: #{expansive_block_forward.5} parent=0 // pred_region
    _
  $region13: #{expansive_block_forward.5} parent=0 // pred_fallthru
    _
  %v14 = vld [vmem:[%s0] sm:$0xf]
  %v15 = vld [vmem:[%s0 + $0x4] sm:$0xf]
  %v16 = vld [vmem:[%s0 + $0x8] sm:$0xf]
  %v17 = vld [vmem:[%s0 + $0xc] sm:$0xf]
  %v18 = vld [vmem:[%s0 + $0x10] sm:$0xf]
  %v19 = vld [vmem:[%s0 + $0x14] sm:$0xf]
  %v20 = vld [vmem:[%s0 + $0x18] sm:$0xf]
  %v21 = vld [vmem:[%s0 + $0x1c] sm:$0xf]
  %v22 = vld [vmem:[%s0 + $0x20] sm:$0xf]
  %v23 = vld [vmem:[%s0 + $0x24] sm:$0xf]
  %v24 = vld [vmem:[%s0 + $0x28] sm:$0xf]
  %v25 = vld [vmem:[%s0 + $0x2c] sm:$0xf]
  %v26 = vld [vmem:[%s0 + $0x30] sm:$0xf]
  %v27 = vld [vmem:[%s0 + $0x34] sm:$0xf]
  %v28 = vld [vmem:[%s0 + $0x38] sm:$0xf]
  %v29 = vld [vmem:[%s0 + $0x3c] sm:$0xf]
  %v30 = vld [vmem:[%s0 + $0x40] sm:$0xf]
  %v31 = vld [vmem:[%s0 + $0x44] sm:$0xf]
  %v32 = vld [vmem:[%s0 + $0x48] sm:$0xf]
  %v33 = vld [vmem:[%s0 + $0x4c] sm:$0xf]
  %v34 = vld [vmem:[%s0 + $0x50] sm:$0xf]
  %v35 = vld [vmem:[%s0 + $0x54] sm:$0xf]
  %v36 = vld [vmem:[%s0 + $0x58] sm:$0xf]
  %v37 = vld [vmem:[%s0 + $0x5c] sm:$0xf]
  %v38 = vld [vmem:[%s0 + $0x60] sm:$0xf]
  %v39 = vld [vmem:[%s0 + $0x64] sm:$0xf]
  %v40 = vld [vmem:[%s0 + $0x68] sm:$0xf]
  %v41 = vld [vmem:[%s0 + $0x6c] sm:$0xf]
  %v42 = vld [vmem:[%s0 + $0x70] sm:$0xf]
  %v43 = vld [vmem:[%s0 + $0x74] sm:$0xf]
  %v44 = vld [vmem:[%s0 + $0x78] sm:$0xf]
  %v45 = vld [vmem:[%s0 + $0x7c] sm:$0xf]
  %v46 = vld [vmem:[%s1] sm:$0xf]
  %v47 = vld [vmem:[%s1 + $0x4] sm:$0xf]
  %v48 = vld [vmem:[%s1 + $0x8] sm:$0xf]
  %v49 = vld [vmem:[%s1 + $0xc] sm:$0xf]
  %v50 = vld [vmem:[%s1 + $0x10] sm:$0xf]
  %v51 = vld [vmem:[%s1 + $0x14] sm:$0xf]
  %v52 = vld [vmem:[%s1 + $0x18] sm:$0xf]
  %v53 = vld [vmem:[%s1 + $0x1c] sm:$0xf]
  %v54 = vld [vmem:[%s1 + $0x20] sm:$0xf]
  %v55 = vld [vmem:[%s1 + $0x24] sm:$0xf]
  %v56 = vld [vmem:[%s1 + $0x28] sm:$0xf]
  %v57 = vld [vmem:[%s1 + $0x2c] sm:$0xf]
  %v58 = vld [vmem:[%s1 + $0x30] sm:$0xf]
  %v59 = vld [vmem:[%s1 + $0x34] sm:$0xf]
  %v60 = vld [vmem:[%s1 + $0x38] sm:$0xf]
  %v61 = vld [vmem:[%s1 + $0x3c] sm:$0xf]
  %v62 = vld [vmem:[%s2] sm:$0x1]
  %v64 = vperm.slane %v62, 0
  %v98 = vunpack.c.l.b16 %v14
  %v99 = vunpack.c.l.b16 %v15
  %v100 = vunpack.c.l.b16 %v16
  %v101 = vunpack.c.l.b16 %v17
  %v102 = vunpack.c.l.b16 %v18
  %v103 = vunpack.c.l.b16 %v19
  %v104 = vunpack.c.l.b16 %v20
  %v105 = vunpack.c.l.b16 %v21
  %v106 = vunpack.c.l.b16 %v22
  %v107 = vunpack.c.l.b16 %v23
  %v108 = vunpack.c.l.b16 %v24
  %v109 = vunpack.c.l.b16 %v25
  %v110 = vunpack.c.l.b16 %v26
  %v111 = vunpack.c.l.b16 %v27
  %v112 = vunpack.c.l.b16 %v28
  %v113 = vunpack.c.l.b16 %v29
  %v114 = vunpack.c.l.b16 %v30
  %v115 = vunpack.c.l.b16 %v31
  %v116 = vunpack.c.l.b16 %v32
  %v117 = vunpack.c.l.b16 %v33
  %v118 = vunpack.c.l.b16 %v34
  %v119 = vunpack.c.l.b16 %v35
  %v120 = vunpack.c.l.b16 %v36
  %v121 = vunpack.c.l.b16 %v37
  %v122 = vunpack.c.l.b16 %v38
  %v123 = vunpack.c.l.b16 %v39
  %v124 = vunpack.c.l.b16 %v40
  %v125 = vunpack.c.l.b16 %v41
  %v126 = vunpack.c.l.b16 %v42
  %v127 = vunpack.c.l.b16 %v43
  %v128 = vunpack.c.l.b16 %v44
  %v129 = vunpack.c.l.b16 %v45
  %v130 = vpack.c.b16 %v99, %v98
  %v131 = vpack.c.b16 %v101, %v100
  %v132 = vpack.c.b16 %v103, %v102
  %v133 = vpack.c.b16 %v105, %v104
  %v134 = vpack.c.b16 %v107, %v106
  %v135 = vpack.c.b16 %v109, %v108
  %v136 = vpack.c.b16 %v111, %v110
  %v137 = vpack.c.b16 %v113, %v112
  %v138 = vpack.c.b16 %v115, %v114
  %v139 = vpack.c.b16 %v117, %v116
  %v140 = vpack.c.b16 %v119, %v118
  %v141 = vpack.c.b16 %v121, %v120
  %v142 = vpack.c.b16 %v123, %v122
  %v143 = vpack.c.b16 %v125, %v124
  %v144 = vpack.c.b16 %v127, %v126
  %v145 = vpack.c.b16 %v129, %v128
  %v178 = vunpack.c.l.b16 %v46
  %v179 = vunpack.c.l.b16 %v47
  %v180 = vunpack.c.l.b16 %v48
  %v181 = vunpack.c.l.b16 %v49
  %v182 = vunpack.c.l.b16 %v50
  %v183 = vunpack.c.l.b16 %v51
  %v184 = vunpack.c.l.b16 %v52
  %v185 = vunpack.c.l.b16 %v53
  %v186 = vunpack.c.l.b16 %v54
  %v187 = vunpack.c.l.b16 %v55
  %v188 = vunpack.c.l.b16 %v56
  %v189 = vunpack.c.l.b16 %v57
  %v190 = vunpack.c.l.b16 %v58
  %v191 = vunpack.c.l.b16 %v59
  %v192 = vunpack.c.l.b16 %v60
  %v193 = vunpack.c.l.b16 %v61
  %v194 = vpack.c.b16 %v179, %v178
  %v195 = vpack.c.b16 %v181, %v180
  %v196 = vpack.c.b16 %v183, %v182
  %v197 = vpack.c.b16 %v185, %v184
  %v198 = vpack.c.b16 %v187, %v186
  %v199 = vpack.c.b16 %v189, %v188
  %v200 = vpack.c.b16 %v191, %v190
  %v201 = vpack.c.b16 %v193, %v192
  %210 = vmatpush.bf16.msra.mxu0 %v201
  %211 = vmatpush.bf16.msra.mxu0 %v200
  %212 = vmatpush.bf16.msra.mxu0 %v199
  %213 = vmatpush.bf16.msra.mxu0 %v198
  %214 = vmatpush.bf16.msra.mxu0 %v197
  %215 = vmatpush.bf16.msra.mxu0 %v196
  %216 = vmatpush.bf16.msra.mxu0 %v195
  %217 = vmatpush.bf16.msra.mxu0 %v194
  %218 = vmatmul.bf16.gmra.mxu0 %v130
  %v219 = vpop.f32.mrf.mxu0
  %v220 = vadd.f32 %v64, %v219
  %v221 = vpop.f32.mrf.mxu0
  %v222 = vadd.f32 %v64, %v221
  %223 = vmatmul.bf16.gmra.mxu0 %v131
  %v224 = vpop.f32.mrf.mxu0
  %v225 = vadd.f32 %v64, %v224
  %v226 = vpop.f32.mrf.mxu0
  %v227 = vadd.f32 %v64, %v226
  %228 = vmatmul.bf16.gmra.mxu0 %v132
  %v229 = vpop.f32.mrf.mxu0
  %v230 = vadd.f32 %v64, %v229
  %v231 = vpop.f32.mrf.mxu0
  %v232 = vadd.f32 %v64, %v231
  %233 = vmatmul.bf16.gmra.mxu0 %v133
  %v234 = vpop.f32.mrf.mxu0
  %v235 = vadd.f32 %v64, %v234
  %v236 = vpop.f32.mrf.mxu0
  %v237 = vadd.f32 %v64, %v236
  %238 = vmatmul.bf16.gmra.mxu0 %v134
  %v239 = vpop.f32.mrf.mxu0
  %v240 = vadd.f32 %v64, %v239
  %v241 = vpop.f32.mrf.mxu0
  %v242 = vadd.f32 %v64, %v241
  %243 = vmatmul.bf16.gmra.mxu0 %v135
  %v244 = vpop.f32.mrf.mxu0
  %v245 = vadd.f32 %v64, %v244
  %v246 = vpop.f32.mrf.mxu0
  %v247 = vadd.f32 %v64, %v246
  %248 = vmatmul.bf16.gmra.mxu0 %v136
  %v249 = vpop.f32.mrf.mxu0
  %v250 = vadd.f32 %v64, %v249
  %v251 = vpop.f32.mrf.mxu0
  %v252 = vadd.f32 %v64, %v251
  %253 = vmatmul.bf16.gmra.mxu0 %v137
  %v254 = vpop.f32.mrf.mxu0
  %v255 = vadd.f32 %v64, %v254
  %v256 = vpop.f32.mrf.mxu0
  %v257 = vadd.f32 %v64, %v256
  %258 = vmatmul.bf16.gmra.mxu0 %v138
  %v259 = vpop.f32.mrf.mxu0
  %v260 = vadd.f32 %v64, %v259
  %v261 = vpop.f32.mrf.mxu0
  %v262 = vadd.f32 %v64, %v261
  %263 = vmatmul.bf16.gmra.mxu0 %v139
  %v264 = vpop.f32.mrf.mxu0
  %v265 = vadd.f32 %v64, %v264
  %v266 = vpop.f32.mrf.mxu0
  %v267 = vadd.f32 %v64, %v266
  %268 = vmatmul.bf16.gmra.mxu0 %v140
  %v269 = vpop.f32.mrf.mxu0
  %v270 = vadd.f32 %v64, %v269
  %v271 = vpop.f32.mrf.mxu0
  %v272 = vadd.f32 %v64, %v271
  %273 = vmatmul.bf16.gmra.mxu0 %v141
  %v274 = vpop.f32.mrf.mxu0
  %v275 = vadd.f32 %v64, %v274
  %v276 = vpop.f32.mrf.mxu0
  %v277 = vadd.f32 %v64, %v276
  %278 = vmatmul.bf16.gmra.mxu0 %v142
  %v279 = vpop.f32.mrf.mxu0
  %v280 = vadd.f32 %v64, %v279
  %v281 = vpop.f32.mrf.mxu0
  %v282 = vadd.f32 %v64, %v281
  %283 = vmatmul.bf16.gmra.mxu0 %v143
  %v284 = vpop.f32.mrf.mxu0
  %v285 = vadd.f32 %v64, %v284
  %v286 = vpop.f32.mrf.mxu0
  %v287 = vadd.f32 %v64, %v286
  %288 = vmatmul.bf16.gmra.mxu0 %v144
  %v289 = vpop.f32.mrf.mxu0
  %v290 = vadd.f32 %v64, %v289
  %v291 = vpop.f32.mrf.mxu0
  %v292 = vadd.f32 %v64, %v291
  %293 = vmatmul.bf16.gmra.mxu0 %v145
  %v294 = vpop.f32.mrf.mxu0
  %v295 = vadd.f32 %v64, %v294
  %v296 = vpop.f32.mrf.mxu0
  %v297 = vadd.f32 %v64, %v296
  %298 = vdwg.mxu0
  %299 = vst [vmem:[%s3] sm:$0xff] %v220
  %300 = vst [vmem:[%s3 + $0x8] sm:$0xff] %v222
  %301 = vst [vmem:[%s3 + $0x10] sm:$0xff] %v225
  %302 = vst [vmem:[%s3 + $0x18] sm:$0xff] %v227
  %303 = vst [vmem:[%s3 + $0x20] sm:$0xff] %v230
  %304 = vst [vmem:[%s3 + $0x28] sm:$0xff] %v232
  %305 = vst [vmem:[%s3 + $0x30] sm:$0xff] %v235
  %306 = vst [vmem:[%s3 + $0x38] sm:$0xff] %v237
  %307 = vst [vmem:[%s3 + $0x40] sm:$0xff] %v240
  %308 = vst [vmem:[%s3 + $0x48] sm:$0xff] %v242
  %309 = vst [vmem:[%s3 + $0x50] sm:$0xff] %v245
  %310 = vst [vmem:[%s3 + $0x58] sm:$0xff] %v247
  %311 = vst [vmem:[%s3 + $0x60] sm:$0xff] %v250
  %312 = vst [vmem:[%s3 + $0x68] sm:$0xff] %v252
  %313 = vst [vmem:[%s3 + $0x70] sm:$0xff] %v255
  %314 = vst [vmem:[%s3 + $0x78] sm:$0xff] %v257
  %315 = vst [vmem:[%s3 + $0x80] sm:$0xff] %v260
  %316 = vst [vmem:[%s3 + $0x88] sm:$0xff] %v262
  %317 = vst [vmem:[%s3 + $0x90] sm:$0xff] %v265
  %318 = vst [vmem:[%s3 + $0x98] sm:$0xff] %v267
  %319 = vst [vmem:[%s3 + $0xa0] sm:$0xff] %v270
  %320 = vst [vmem:[%s3 + $0xa8] sm:$0xff] %v272
  %321 = vst [vmem:[%s3 + $0xb0] sm:$0xff] %v275
  %322 = vst [vmem:[%s3 + $0xb8] sm:$0xff] %v277
  %323 = vst [vmem:[%s3 + $0xc0] sm:$0xff] %v280
  %324 = vst [vmem:[%s3 + $0xc8] sm:$0xff] %v282
  %325 = vst [vmem:[%s3 + $0xd0] sm:$0xff] %v285
  %326 = vst [vmem:[%s3 + $0xd8] sm:$0xff] %v287
  %327 = vst [vmem:[%s3 + $0xe0] sm:$0xff] %v290
  %328 = vst [vmem:[%s3 + $0xe8] sm:$0xff] %v292
  %329 = vst [vmem:[%s3 + $0xf0] sm:$0xff] %v295
  %330 = vst [vmem:[%s3 + $0xf8] sm:$0xff] %v297
  // Predicated region
  $region14: #{expansive_block_forward.5} parent=0 // pred_check
    _
  $region15: #{expansive_block_forward.5} parent=0 // pred_check_branch
    %332 = sbr.rel (0) target = $region17
  $region16: #{expansive_block_forward.5} parent=0 // pred_region
    _
  $region17: #{expansive_block_forward.5} parent=0 // pred_fallthru
    _
  // Predicated region
  $region18: #{expansive_block_forward.5} parent=0 // pred_check
    _
  $region19: #{expansive_block_forward.5} parent=0 // pred_check_branch
    %334 = sbr.rel (0) target = $region21
  $region20: #{expansive_block_forward.5} parent=0 // pred_region
    _
  $region21: #{expansive_block_forward.5} parent=0 // pred_fallthru
    _

// kernel: expansive_block_forward.7
$region0: #{expansive_block_forward.7}
  #allocation0 [shape = 'u32[]', space=smem, size = 0x4, offset = 0x4, fixed_abs, tag = 'smem constant byte address 0x4 - core index']
  #allocation1 [shape = 'u32[72,128]{1,0:T(1,128)}', space=vmem, size = 0x9000, scoped, tag = 'internal scratch']
  %s0 = inlined_call_operand.vmem [shape: f32[512,128], index: 0, kind: input, shape index: {}]
  %s1 = inlined_call_operand.vmem [shape: f32[1,128], index: 1, kind: input, shape index: {}]
  %s2 = inlined_call_operand.vmem [shape: f32[1,128], index: 2, kind: input, shape index: {}]
  %s3 = inlined_call_operand.vmem [shape: f32[512,128], index: 3, kind: output, shape index: {}]
  %s4 = sld [smem:[#allocation0]]
  $region45: #{expansive_block_forward.7} parent=0
    _
  %s6 = ssub.s32 1, %s4
  %s7 = scalar_select 0, %s6, %s4
  loop: start=0, step=1, limit=4
  $region2: #{expansive_block_forward.7} parent=0 // loop_pre_header
    _
  $region3: #{expansive_block_forward.7} parent=0 // loop_header
    %s9 = sphi 0, %s13
    %p10 = scmp.ge.s32.totalorder %s9, 4
    %s19 = sphi 0, %s21
    %s22 = sphi 0, %s19
    %s23 = sphi 0, %s22
    %s39 = sphi 0, %s23
    %s43 = sphi 0, %s43
    %s45 = sphi 0, %s43
    %s46 = sphi 0, %s45
    %s60 = sphi 0, %s46
    %s64 = sphi 0, %s64
    %s66 = sphi 0, %s64
    %s67 = sphi 0, %s66
    %s81 = sphi 0, %s67
    %s87 = sphi 0, %s89
    %s90 = sphi 0, %s87
    %s91 = sphi 0, %s90
    %s107 = sphi 0, %s91
  $region4: #{expansive_block_forward.7} parent=0 // loop_header_branch
    %12 = sbr.rel (%p10) target = $region8
  $region5: #{expansive_block_forward.7} parent=0 // loop_body
    %s14 = ssub.s32 %s9, 1
    %s15 = ssub.s32 %s9, 2
    %s16 = sadd.s32 %s9, 1
    %s17 = ssub.s32 %s9, %s16
    %p18 = scmp.eq.s32.totalorder %s17, 0
    %s20 = sadd.s32 %s19, 1
    %s21 = scalar_select %p18, %s19, %s20
    %p24 = pneg %p18
    %p25 = scmp.eq.s32.totalorder %s9, 1
    %p26 = por %p24, %p25
    %p27 = scmp.ne.s32.totalorder %s19, %s22
    %p28 = scmp.eq.s32.totalorder %s9, 0
    %p29 = por %p27, %p28
    %p30 = scmp.ne.s32.totalorder %s19, %s22
    %p31 = scmp.eq.s32.totalorder %s14, 1
    %p32 = por %p30, %p31
    %p33 = scmp.ne.s32.totalorder %s22, %s23
    %p34 = scmp.eq.s32.totalorder %s14, 0
    %p35 = por %p33, %p34
    %p36 = scmp.ne.s32.totalorder %s22, %s23
    %p37 = scmp.eq.s32.totalorder %s15, 1
    %p38 = por %p36, %p37
    %p40 = scmp.ne.s32.totalorder %s23, %s39
    %p41 = scmp.eq.s32.totalorder %s15, 0
    %p42 = por %p40, %p41
    %s44 = sadd.s32 %s43, 1
    %p47 = scmp.eq.s32.totalorder %s9, 1
    %p48 = scmp.ne.s32.totalorder %s43, %s45
    %p49 = scmp.eq.s32.totalorder %s9, 0
    %p50 = por %p48, %p49
    %p51 = scmp.ne.s32.totalorder %s43, %s45
    %p52 = scmp.eq.s32.totalorder %s14, 1
    %p53 = por %p51, %p52
    %p54 = scmp.ne.s32.totalorder %s45, %s46
    %p55 = scmp.eq.s32.totalorder %s14, 0
    %p56 = por %p54, %p55
    %p57 = scmp.ne.s32.totalorder %s45, %s46
    %p58 = scmp.eq.s32.totalorder %s15, 1
    %p59 = por %p57, %p58
    %p61 = scmp.ne.s32.totalorder %s46, %s60
    %p62 = scmp.eq.s32.totalorder %s15, 0
    %p63 = por %p61, %p62
    %s65 = sadd.s32 %s64, 1
    %p68 = scmp.eq.s32.totalorder %s9, 1
    %p69 = scmp.ne.s32.totalorder %s64, %s66
    %p70 = scmp.eq.s32.totalorder %s9, 0
    %p71 = por %p69, %p70
    %p72 = scmp.ne.s32.totalorder %s64, %s66
    %p73 = scmp.eq.s32.totalorder %s14, 1
    %p74 = por %p72, %p73
    %p75 = scmp.ne.s32.totalorder %s66, %s67
    %p76 = scmp.eq.s32.totalorder %s14, 0
    %p77 = por %p75, %p76
    %p78 = scmp.ne.s32.totalorder %s66, %s67
    %p79 = scmp.eq.s32.totalorder %s15, 1
    %p80 = por %p78, %p79
    %p82 = scmp.ne.s32.totalorder %s67, %s81
    %p83 = scmp.eq.s32.totalorder %s15, 0
    %p84 = por %p82, %p83
    %s85 = ssub.s32 %s9, %s16
    %p86 = scmp.eq.s32.totalorder %s85, 0
    %s88 = sadd.s32 %s87, 1
    %s89 = scalar_select %p86, %s87, %s88
    %p92 = pneg %p86
    %p93 = scmp.eq.s32.totalorder %s9, 1
    %p94 = por %p92, %p93
    %p95 = scmp.ne.s32.totalorder %s87, %s90
    %p96 = scmp.eq.s32.totalorder %s9, 0
    %p97 = por %p95, %p96
    %p98 = scmp.ne.s32.totalorder %s87, %s90
    %p99 = scmp.eq.s32.totalorder %s14, 1
    %p100 = por %p98, %p99
    %p101 = scmp.ne.s32.totalorder %s90, %s91
    %p102 = scmp.eq.s32.totalorder %s14, 0
    %p103 = por %p101, %p102
    %p104 = scmp.ne.s32.totalorder %s90, %s91
    %p105 = scmp.eq.s32.totalorder %s15, 1
    %p106 = por %p104, %p105
    %p108 = scmp.ne.s32.totalorder %s91, %s107
    %p109 = scmp.eq.s32.totalorder %s15, 0
    %p110 = por %p108, %p109
    %p111 = scmp.le.s32.totalorder 1, %s9
    %p112 = scmp.lt.s32.totalorder %s9, 3
    %p113 = pnand %p111, %p112
    %p114 = pneg %p113
    // Predicated region
    $region9: #{expansive_block_forward.7} parent=5 // pred_check
      _
    $region10: #{expansive_block_forward.7} parent=5 // pred_check_branch
      %116 = sbr.rel (%p113) target = $region12
    $region11: #{expansive_block_forward.7} parent=5 // pred_region
      %s117 = ssub.s32 %s9, 1
      // Predicated region
      $region13: #{expansive_block_forward.7} parent=11 // pred_check
        %p118 = pneg %p56
      $region14: #{expansive_block_forward.7} parent=11 // pred_check_branch
        %120 = sbr.rel (%p118) target = $region16
      $region15: #{expansive_block_forward.7} parent=11 // pred_region
        _
      $region16: #{expansive_block_forward.7} parent=11 // pred_fallthru
        _
      // Predicated region
      $region17: #{expansive_block_forward.7} parent=11 // pred_check
        %p121 = pneg %p77
      $region18: #{expansive_block_forward.7} parent=11 // pred_check_branch
        %123 = sbr.rel (%p121) target = $region20
      $region19: #{expansive_block_forward.7} parent=11 // pred_region
        _
      $region20: #{expansive_block_forward.7} parent=11 // pred_fallthru
        _
    $region12: #{expansive_block_forward.7} parent=5 // pred_fallthru
      _
    %p124 = scmp.lt.s32.totalorder %s9, 2
    // Predicated region
    $region21: #{expansive_block_forward.7} parent=5 // pred_check
      %p125 = pneg %p124
    $region22: #{expansive_block_forward.7} parent=5 // pred_check_branch
      %127 = sbr.rel (%p125) target = $region24
    $region23: #{expansive_block_forward.7} parent=5 // pred_region
      // Predicated region
      $region25: #{expansive_block_forward.7} parent=23 // pred_check
        %p128 = pneg %p29
      $region26: #{expansive_block_forward.7} parent=23 // pred_check_branch
        %130 = sbr.rel (%p128) target = $region28
      $region27: #{expansive_block_forward.7} parent=23 // pred_region
        %s131 = smul.u32 32, %s9
        %p132 = scmp.lt.s32.totalorder %s131, 63
        %s133 = scalar_select %p132, %s131, 63
        %s134 = smul.addr %s133, 8
        %s135 = scalar_lea.vmem %s0, %s134
        %s136 = smul.u32 32, %s9
      $region28: #{expansive_block_forward.7} parent=23 // pred_fallthru
        _
    $region24: #{expansive_block_forward.7} parent=5 // pred_fallthru
      _
    %p137 = scmp.le.s32.totalorder 1, %s9
    %p138 = scmp.lt.s32.totalorder %s9, 3
    %p139 = pnand %p137, %p138
    %p140 = pneg %p139
    // Predicated region
    $region29: #{expansive_block_forward.7} parent=5 // pred_check
      _
    $region30: #{expansive_block_forward.7} parent=5 // pred_check_branch
      %142 = sbr.rel (%p139) target = $region32
    $region31: #{expansive_block_forward.7} parent=5 // pred_region
      %s143 = ssub.s32 %s9, 1
      %s144 = smul.u32 32, %s14
      %p145 = scmp.lt.s32.totalorder %s144, 63
      %s146 = scalar_select %p145, %s144, 63
      %s147 = smul.addr %s146, 8
      %s148 = scalar_lea.vmem %s0, %s147
      %p149 = pneg %p35
      %p150 = pneg %p32
      %p151 = pneg %p56
      %p152 = pneg %p53
      %p153 = pneg %p77
      %p154 = pneg %p74
      %p155 = pneg %p103
      %p156 = pneg %p100
      %s157 = smul.u32 32, %s14
      %p158 = scmp.lt.s32.totalorder %s157, 63
      %s159 = scalar_select %p158, %s157, 63
      %s160 = smul.addr %s159, 8
      %s161 = scalar_lea.vmem %s3, %s160
      %s162 = smul.u32 32, %s14
      %p163 = scmp.lt.s32.totalorder %s162, 63
      %s164 = scalar_select %p163, %s162, 63
      %s165 = smul.addr %s164, 8
      %s166 = scalar_lea.vmem %s0, %s165
      %s167 = smul.u32 32, %s14
      %s168 = smul.u32 32, %s14
      %p169 = scmp.lt.s32.totalorder %s168, 63
      %s170 = scalar_select %p169, %s168, 63
      %s171 = smul.addr %s170, 8
      %s172 = scalar_lea.vmem %s3, %s171
      %s173 = smul.u32 32, %s14
      %v174 = vld [vmem:[%s166] sm:$0xff]
      %v175 = vld [vmem:[%s166 + $0x8] sm:$0xff]
      %v176 = vld [vmem:[%s166 + $0x10] sm:$0xff]
      %v177 = vld [vmem:[%s166 + $0x18] sm:$0xff]
      %v178 = vld [vmem:[%s166 + $0x20] sm:$0xff]
      %v179 = vld [vmem:[%s166 + $0x28] sm:$0xff]
      %v180 = vld [vmem:[%s166 + $0x30] sm:$0xff]
      %v181 = vld [vmem:[%s166 + $0x38] sm:$0xff]
      %v182 = vld [vmem:[%s166 + $0x40] sm:$0xff]
      %v183 = vld [vmem:[%s166 + $0x48] sm:$0xff]
      %v184 = vld [vmem:[%s166 + $0x50] sm:$0xff]
      %v185 = vld [vmem:[%s166 + $0x58] sm:$0xff]
      %v186 = vld [vmem:[%s166 + $0x60] sm:$0xff]
      %v187 = vld [vmem:[%s166 + $0x68] sm:$0xff]
      %v188 = vld [vmem:[%s166 + $0x70] sm:$0xff]
      %v189 = vld [vmem:[%s166 + $0x78] sm:$0xff]
      %v190 = vld [vmem:[%s166 + $0x80] sm:$0xff]
      %v191 = vld [vmem:[%s166 + $0x88] sm:$0xff]
      %v192 = vld [vmem:[%s166 + $0x90] sm:$0xff]
      %v193 = vld [vmem:[%s166 + $0x98] sm:$0xff]
      %v194 = vld [vmem:[%s166 + $0xa0] sm:$0xff]
      %v195 = vld [vmem:[%s166 + $0xa8] sm:$0xff]
      %v196 = vld [vmem:[%s166 + $0xb0] sm:$0xff]
      %v197 = vld [vmem:[%s166 + $0xb8] sm:$0xff]
      %v198 = vld [vmem:[%s166 + $0xc0] sm:$0xff]
      %v199 = vld [vmem:[%s166 + $0xc8] sm:$0xff]
      %v200 = vld [vmem:[%s166 + $0xd0] sm:$0xff]
      %v201 = vld [vmem:[%s166 + $0xd8] sm:$0xff]
      %v202 = vld [vmem:[%s166 + $0xe0] sm:$0xff]
      %v203 = vld [vmem:[%s166 + $0xe8] sm:$0xff]
      %v204 = vld [vmem:[%s166 + $0xf0] sm:$0xff]
      %v205 = vld [vmem:[%s166 + $0xf8] sm:$0xff]
      %v206 = vld [vmem:[%s1] sm:$0x1]
      %v208 = vperm.slane %v206, 0
      %v210 = vmul.f32 %v174, %v208
      %v211 = vmul.f32 %v175, %v208
      %v212 = vmul.f32 %v176, %v208
      %v213 = vmul.f32 %v177, %v208
      %v214 = vmul.f32 %v178, %v208
      %v215 = vmul.f32 %v179, %v208
      %v216 = vmul.f32 %v180, %v208
      %v217 = vmul.f32 %v181, %v208
      %v218 = vmul.f32 %v182, %v208
      %v219 = vmul.f32 %v183, %v208
      %v220 = vmul.f32 %v184, %v208
      %v221 = vmul.f32 %v185, %v208
      %v222 = vmul.f32 %v186, %v208
      %v223 = vmul.f32 %v187, %v208
      %v224 = vmul.f32 %v188, %v208
      %v225 = vmul.f32 %v189, %v208
      %v226 = vmul.f32 %v190, %v208
      %v227 = vmul.f32 %v191, %v208
      %v228 = vmul.f32 %v192, %v208
      %v229 = vmul.f32 %v193, %v208
      %v230 = vmul.f32 %v194, %v208
      %v231 = vmul.f32 %v195, %v208
      %v232 = vmul.f32 %v196, %v208
      %v233 = vmul.f32 %v197, %v208
      %v234 = vmul.f32 %v198, %v208
      %v235 = vmul.f32 %v199, %v208
      %v236 = vmul.f32 %v200, %v208
      %v237 = vmul.f32 %v201, %v208
      %v238 = vmul.f32 %v202, %v208
      %v239 = vmul.f32 %v203, %v208
      %v240 = vmul.f32 %v204, %v208
      %v241 = vmul.f32 %v205, %v208
      %v242 = vld [vmem:[%s2] sm:$0x1]
      %v244 = vperm.slane %v242, 0
      %v246 = vadd.f32 %v210, %v244
      %v247 = vadd.f32 %v211, %v244
      %v248 = vadd.f32 %v212, %v244
      %v249 = vadd.f32 %v213, %v244
      %v250 = vadd.f32 %v214, %v244
      %v251 = vadd.f32 %v215, %v244
      %v252 = vadd.f32 %v216, %v244
      %v253 = vadd.f32 %v217, %v244
      %v254 = vadd.f32 %v218, %v244
      %v255 = vadd.f32 %v219, %v244
      %v256 = vadd.f32 %v220, %v244
      %v257 = vadd.f32 %v221, %v244
      %v258 = vadd.f32 %v222, %v244
      %v259 = vadd.f32 %v223, %v244
      %v260 = vadd.f32 %v224, %v244
      %v261 = vadd.f32 %v225, %v244
      %v262 = vadd.f32 %v226, %v244
      %v263 = vadd.f32 %v227, %v244
      %v264 = vadd.f32 %v228, %v244
      %v265 = vadd.f32 %v229, %v244
      %v266 = vadd.f32 %v230, %v244
      %v267 = vadd.f32 %v231, %v244
      %v268 = vadd.f32 %v232, %v244
      %v269 = vadd.f32 %v233, %v244
      %v270 = vadd.f32 %v234, %v244
      %v271 = vadd.f32 %v235, %v244
      %v272 = vadd.f32 %v236, %v244
      %v273 = vadd.f32 %v237, %v244
      %v274 = vadd.f32 %v238, %v244
      %v275 = vadd.f32 %v239, %v244
      %v276 = vadd.f32 %v240, %v244
      %v277 = vadd.f32 %v241, %v244
      %278 = vst [vmem:[%s172] sm:$0xff] %v246
      %279 = vst [vmem:[%s172 + $0x8] sm:$0xff] %v247
      %280 = vst [vmem:[%s172 + $0x10] sm:$0xff] %v248
      %281 = vst [vmem:[%s172 + $0x18] sm:$0xff] %v249
      %282 = vst [vmem:[%s172 + $0x20] sm:$0xff] %v250
      %283 = vst [vmem:[%s172 + $0x28] sm:$0xff] %v251
      %284 = vst [vmem:[%s172 + $0x30] sm:$0xff] %v252
      %285 = vst [vmem:[%s172 + $0x38] sm:$0xff] %v253
      %286 = vst [vmem:[%s172 + $0x40] sm:$0xff] %v254
      %287 = vst [vmem:[%s172 + $0x48] sm:$0xff] %v255
      %288 = vst [vmem:[%s172 + $0x50] sm:$0xff] %v256
      %289 = vst [vmem:[%s172 + $0x58] sm:$0xff] %v257
      %290 = vst [vmem:[%s172 + $0x60] sm:$0xff] %v258
      %291 = vst [vmem:[%s172 + $0x68] sm:$0xff] %v259
      %292 = vst [vmem:[%s172 + $0x70] sm:$0xff] %v260
      %293 = vst [vmem:[%s172 + $0x78] sm:$0xff] %v261
      %294 = vst [vmem:[%s172 + $0x80] sm:$0xff] %v262
      %295 = vst [vmem:[%s172 + $0x88] sm:$0xff] %v263
      %296 = vst [vmem:[%s172 + $0x90] sm:$0xff] %v264
      %297 = vst [vmem:[%s172 + $0x98] sm:$0xff] %v265
      %298 = vst [vmem:[%s172 + $0xa0] sm:$0xff] %v266
      %299 = vst [vmem:[%s172 + $0xa8] sm:$0xff] %v267
      %300 = vst [vmem:[%s172 + $0xb0] sm:$0xff] %v268
      %301 = vst [vmem:[%s172 + $0xb8] sm:$0xff] %v269
      %302 = vst [vmem:[%s172 + $0xc0] sm:$0xff] %v270
      %303 = vst [vmem:[%s172 + $0xc8] sm:$0xff] %v271
      %304 = vst [vmem:[%s172 + $0xd0] sm:$0xff] %v272
      %305 = vst [vmem:[%s172 + $0xd8] sm:$0xff] %v273
      %306 = vst [vmem:[%s172 + $0xe0] sm:$0xff] %v274
      %307 = vst [vmem:[%s172 + $0xe8] sm:$0xff] %v275
      %308 = vst [vmem:[%s172 + $0xf0] sm:$0xff] %v276
      %309 = vst [vmem:[%s172 + $0xf8] sm:$0xff] %v277
      %s310 = smul.u32 32, %s14
      %p311 = scmp.lt.s32.totalorder %s310, 63
      %s312 = scalar_select %p311, %s310, 63
      %s313 = smul.addr %s312, 8
      %s314 = scalar_lea.vmem %s3, %s313
      // Predicated region
      $region33: #{expansive_block_forward.7} parent=31 // pred_check
        %p315 = pneg %p100
      $region34: #{expansive_block_forward.7} parent=31 // pred_check_branch
        %317 = sbr.rel (%p315) target = $region36
      $region35: #{expansive_block_forward.7} parent=31 // pred_region
        %s318 = smul.u32 32, %s14
      $region36: #{expansive_block_forward.7} parent=31 // pred_fallthru
        _
    $region32: #{expansive_block_forward.7} parent=5 // pred_fallthru
      _
    %p319 = scmp.le.s32.totalorder 2, %s9
    // Predicated region
    $region37: #{expansive_block_forward.7} parent=5 // pred_check
      %p320 = pneg %p319
    $region38: #{expansive_block_forward.7} parent=5 // pred_check_branch
      %322 = sbr.rel (%p320) target = $region40
    $region39: #{expansive_block_forward.7} parent=5 // pred_region
      %s323 = ssub.s32 %s9, 2
      // Predicated region
      $region41: #{expansive_block_forward.7} parent=39 // pred_check
        %p324 = pneg %p106
      $region42: #{expansive_block_forward.7} parent=39 // pred_check_branch
        %326 = sbr.rel (%p324) target = $region44
      $region43: #{expansive_block_forward.7} parent=39 // pred_region
        %s327 = smul.u32 32, %s15
        %p328 = scmp.lt.s32.totalorder %s327, 63
        %s329 = scalar_select %p328, %s327, 63
        %s330 = smul.addr %s329, 8
        %s331 = scalar_lea.vmem %s3, %s330
      $region44: #{expansive_block_forward.7} parent=39 // pred_fallthru
        _
    $region40: #{expansive_block_forward.7} parent=5 // pred_fallthru
      _
  $region6: #{expansive_block_forward.7} parent=0 // loop_footer
    %s13 = sadd.s32 1, %s9
  $region7: #{expansive_block_forward.7} parent=0 // loop_footer_branch
    %8 = sbr.rel target = $region3
  $region8: #{expansive_block_forward.7} parent=0 // loop_exit
    _

// kernel: expansive_block_forward.6
$region0: #{expansive_block_forward.6}
  #allocation0 [shape = 'u32[]', space=smem, size = 0x4, offset = 0x4, fixed_abs, tag = 'smem constant byte address 0x4 - core index']
  #allocation1 [shape = 'u32[72,128]{1,0:T(1,128)}', space=vmem, size = 0x9000, scoped, tag = 'internal scratch']
  %s0 = inlined_call_operand.vmem [shape: bf16[512,128], index: 0, kind: input, shape index: {}]
  %s1 = inlined_call_operand.vmem [shape: bf16[128,128], index: 1, kind: input, shape index: {}]
  %s2 = inlined_call_operand.vmem [shape: f32[1,128], index: 2, kind: input, shape index: {}]
  %s3 = inlined_call_operand.vmem [shape: f32[512,128], index: 3, kind: output, shape index: {0}]
  %s4 = inlined_call_operand.vmem [shape: f32[1,128], index: 4, kind: output, shape index: {1}]
  %s5 = inlined_call_operand.vmem [shape: f32[1,128], index: 5, kind: output, shape index: {2}]
  %6 = xla_tuple %s3, %s4, %s5
  %s7 = sld [smem:[#allocation0]]
  $region65: #{expansive_block_forward.6} parent=0
    _
  %s9 = ssub.s32 1, %s7
  %s10 = scalar_select 0, %s9, %s7
  loop: start=0, step=1, limit=4
  $region2: #{expansive_block_forward.6} parent=0 // loop_pre_header
    _
  $region3: #{expansive_block_forward.6} parent=0 // loop_header
    %s12 = sphi 0, %s16
    %p13 = scmp.ge.s32.totalorder %s12, 4
    %s22 = sphi 0, %s24
    %s25 = sphi 0, %s22
    %s26 = sphi 0, %s25
    %s42 = sphi 0, %s26
    %s46 = sphi 0, %s46
    %s48 = sphi 0, %s46
    %s49 = sphi 0, %s48
    %s63 = sphi 0, %s49
    %s67 = sphi 0, %s67
    %s69 = sphi 0, %s67
    %s70 = sphi 0, %s69
    %s84 = sphi 0, %s70
    %s90 = sphi 0, %s92
    %s93 = sphi 0, %s90
    %s94 = sphi 0, %s93
    %s110 = sphi 0, %s94
    %s114 = sphi 0, %s114
    %s116 = sphi 0, %s114
    %s117 = sphi 0, %s116
    %s131 = sphi 0, %s117
    %s135 = sphi 0, %s135
    %s137 = sphi 0, %s135
    %s138 = sphi 0, %s137
    %s152 = sphi 0, %s138
  $region4: #{expansive_block_forward.6} parent=0 // loop_header_branch
    %15 = sbr.rel (%p13) target = $region8
  $region5: #{expansive_block_forward.6} parent=0 // loop_body
    %s17 = ssub.s32 %s12, 1
    %s18 = ssub.s32 %s12, 2
    %s19 = sadd.s32 %s12, 1
    %s20 = ssub.s32 %s12, %s19
    %p21 = scmp.eq.s32.totalorder %s20, 0
    %s23 = sadd.s32 %s22, 1
    %s24 = scalar_select %p21, %s22, %s23
    %p27 = pneg %p21
    %p28 = scmp.eq.s32.totalorder %s12, 1
    %p29 = por %p27, %p28
    %p30 = scmp.ne.s32.totalorder %s22, %s25
    %p31 = scmp.eq.s32.totalorder %s12, 0
    %p32 = por %p30, %p31
    %p33 = scmp.ne.s32.totalorder %s22, %s25
    %p34 = scmp.eq.s32.totalorder %s17, 1
    %p35 = por %p33, %p34
    %p36 = scmp.ne.s32.totalorder %s25, %s26
    %p37 = scmp.eq.s32.totalorder %s17, 0
    %p38 = por %p36, %p37
    %p39 = scmp.ne.s32.totalorder %s25, %s26
    %p40 = scmp.eq.s32.totalorder %s18, 1
    %p41 = por %p39, %p40
    %p43 = scmp.ne.s32.totalorder %s26, %s42
    %p44 = scmp.eq.s32.totalorder %s18, 0
    %p45 = por %p43, %p44
    %s47 = sadd.s32 %s46, 1
    %p50 = scmp.eq.s32.totalorder %s12, 1
    %p51 = scmp.ne.s32.totalorder %s46, %s48
    %p52 = scmp.eq.s32.totalorder %s12, 0
    %p53 = por %p51, %p52
    %p54 = scmp.ne.s32.totalorder %s46, %s48
    %p55 = scmp.eq.s32.totalorder %s17, 1
    %p56 = por %p54, %p55
    %p57 = scmp.ne.s32.totalorder %s48, %s49
    %p58 = scmp.eq.s32.totalorder %s17, 0
    %p59 = por %p57, %p58
    %p60 = scmp.ne.s32.totalorder %s48, %s49
    %p61 = scmp.eq.s32.totalorder %s18, 1
    %p62 = por %p60, %p61
    %p64 = scmp.ne.s32.totalorder %s49, %s63
    %p65 = scmp.eq.s32.totalorder %s18, 0
    %p66 = por %p64, %p65
    %s68 = sadd.s32 %s67, 1
    %p71 = scmp.eq.s32.totalorder %s12, 1
    %p72 = scmp.ne.s32.totalorder %s67, %s69
    %p73 = scmp.eq.s32.totalorder %s12, 0
    %p74 = por %p72, %p73
    %p75 = scmp.ne.s32.totalorder %s67, %s69
    %p76 = scmp.eq.s32.totalorder %s17, 1
    %p77 = por %p75, %p76
    %p78 = scmp.ne.s32.totalorder %s69, %s70
    %p79 = scmp.eq.s32.totalorder %s17, 0
    %p80 = por %p78, %p79
    %p81 = scmp.ne.s32.totalorder %s69, %s70
    %p82 = scmp.eq.s32.totalorder %s18, 1
    %p83 = por %p81, %p82
    %p85 = scmp.ne.s32.totalorder %s70, %s84
    %p86 = scmp.eq.s32.totalorder %s18, 0
    %p87 = por %p85, %p86
    %s88 = ssub.s32 %s12, %s19
    %p89 = scmp.eq.s32.totalorder %s88, 0
    %s91 = sadd.s32 %s90, 1
    %s92 = scalar_select %p89, %s90, %s91
    %p95 = pneg %p89
    %p96 = scmp.eq.s32.totalorder %s12, 1
    %p97 = por %p95, %p96
    %p98 = scmp.ne.s32.totalorder %s90, %s93
    %p99 = scmp.eq.s32.totalorder %s12, 0
    %p100 = por %p98, %p99
    %p101 = scmp.ne.s32.totalorder %s90, %s93
    %p102 = scmp.eq.s32.totalorder %s17, 1
    %p103 = por %p101, %p102
    %p104 = scmp.ne.s32.totalorder %s93, %s94
    %p105 = scmp.eq.s32.totalorder %s17, 0
    %p106 = por %p104, %p105
    %p107 = scmp.ne.s32.totalorder %s93, %s94
    %p108 = scmp.eq.s32.totalorder %s18, 1
    %p109 = por %p107, %p108
    %p111 = scmp.ne.s32.totalorder %s94, %s110
    %p112 = scmp.eq.s32.totalorder %s18, 0
    %p113 = por %p111, %p112
    %s115 = sadd.s32 %s114, 1
    %p118 = scmp.eq.s32.totalorder %s12, 1
    %p119 = scmp.ne.s32.totalorder %s114, %s116
    %p120 = scmp.eq.s32.totalorder %s12, 0
    %p121 = por %p119, %p120
    %p122 = scmp.ne.s32.totalorder %s114, %s116
    %p123 = scmp.eq.s32.totalorder %s17, 1
    %p124 = por %p122, %p123
    %p125 = scmp.ne.s32.totalorder %s116, %s117
    %p126 = scmp.eq.s32.totalorder %s17, 0
    %p127 = por %p125, %p126
    %p128 = scmp.ne.s32.totalorder %s116, %s117
    %p129 = scmp.eq.s32.totalorder %s18, 1
    %p130 = por %p128, %p129
    %p132 = scmp.ne.s32.totalorder %s117, %s131
    %p133 = scmp.eq.s32.totalorder %s18, 0
    %p134 = por %p132, %p133
    %s136 = sadd.s32 %s135, 1
    %p139 = scmp.eq.s32.totalorder %s12, 1
    %p140 = scmp.ne.s32.totalorder %s135, %s137
    %p141 = scmp.eq.s32.totalorder %s12, 0
    %p142 = por %p140, %p141
    %p143 = scmp.ne.s32.totalorder %s135, %s137
    %p144 = scmp.eq.s32.totalorder %s17, 1
    %p145 = por %p143, %p144
    %p146 = scmp.ne.s32.totalorder %s137, %s138
    %p147 = scmp.eq.s32.totalorder %s17, 0
    %p148 = por %p146, %p147
    %p149 = scmp.ne.s32.totalorder %s137, %s138
    %p150 = scmp.eq.s32.totalorder %s18, 1
    %p151 = por %p149, %p150
    %p153 = scmp.ne.s32.totalorder %s138, %s152
    %p154 = scmp.eq.s32.totalorder %s18, 0
    %p155 = por %p153, %p154
    %p156 = scmp.le.s32.totalorder 1, %s12
    %p157 = scmp.lt.s32.totalorder %s12, 3
    %p158 = pnand %p156, %p157
    %p159 = pneg %p158
    // Predicated region
    $region9: #{expansive_block_forward.6} parent=5 // pred_check
      _
    $region10: #{expansive_block_forward.6} parent=5 // pred_check_branch
      %161 = sbr.rel (%p158) target = $region12
    $region11: #{expansive_block_forward.6} parent=5 // pred_region
      %s162 = ssub.s32 %s12, 1
      // Predicated region
      $region13: #{expansive_block_forward.6} parent=11 // pred_check
        %p163 = pneg %p59
      $region14: #{expansive_block_forward.6} parent=11 // pred_check_branch
        %165 = sbr.rel (%p163) target = $region16
      $region15: #{expansive_block_forward.6} parent=11 // pred_region
        _
      $region16: #{expansive_block_forward.6} parent=11 // pred_fallthru
        _
      // Predicated region
      $region17: #{expansive_block_forward.6} parent=11 // pred_check
        %p166 = pneg %p80
      $region18: #{expansive_block_forward.6} parent=11 // pred_check_branch
        %168 = sbr.rel (%p166) target = $region20
      $region19: #{expansive_block_forward.6} parent=11 // pred_region
        _
      $region20: #{expansive_block_forward.6} parent=11 // pred_fallthru
        _
    $region12: #{expansive_block_forward.6} parent=5 // pred_fallthru
      _
    %p169 = scmp.lt.s32.totalorder %s12, 2
    // Predicated region
    $region21: #{expansive_block_forward.6} parent=5 // pred_check
      %p170 = pneg %p169
    $region22: #{expansive_block_forward.6} parent=5 // pred_check_branch
      %172 = sbr.rel (%p170) target = $region24
    $region23: #{expansive_block_forward.6} parent=5 // pred_region
      // Predicated region
      $region25: #{expansive_block_forward.6} parent=23 // pred_check
        %p173 = pneg %p32
      $region26: #{expansive_block_forward.6} parent=23 // pred_check_branch
        %175 = sbr.rel (%p173) target = $region28
      $region27: #{expansive_block_forward.6} parent=23 // pred_region
        %s176 = smul.u32 32, %s12
        %p177 = scmp.lt.s32.totalorder %s176, 63
        %s178 = scalar_select %p177, %s176, 63
        %s179 = smul.addr %s178, 4
        %s180 = scalar_lea.vmem %s0, %s179
        %s181 = smul.u32 32, %s12
      $region28: #{expansive_block_forward.6} parent=23 // pred_fallthru
        _
    $region24: #{expansive_block_forward.6} parent=5 // pred_fallthru
      _
    %p182 = scmp.le.s32.totalorder 1, %s12
    %p183 = scmp.lt.s32.totalorder %s12, 3
    %p184 = pnand %p182, %p183
    %p185 = pneg %p184
    // Predicated region
    $region29: #{expansive_block_forward.6} parent=5 // pred_check
      _
    $region30: #{expansive_block_forward.6} parent=5 // pred_check_branch
      %187 = sbr.rel (%p184) target = $region32
    $region31: #{expansive_block_forward.6} parent=5 // pred_region
      %s188 = ssub.s32 %s12, 1
      %s189 = smul.u32 32, %s17
      %p190 = scmp.lt.s32.totalorder %s189, 63
      %s191 = scalar_select %p190, %s189, 63
      %s192 = smul.addr %s191, 4
      %s193 = scalar_lea.vmem %s0, %s192
      %p194 = pneg %p38
      %p195 = pneg %p35
      %p196 = pneg %p59
      %p197 = pneg %p56
      %p198 = pneg %p80
      %p199 = pneg %p77
      %p200 = pneg %p106
      %p201 = pneg %p103
      %s202 = smul.u32 32, %s17
      %p203 = scmp.lt.s32.totalorder %s202, 63
      %s204 = scalar_select %p203, %s202, 63
      %s205 = smul.addr %s204, 8
      %s206 = scalar_lea.vmem %s3, %s205
      %p207 = pneg %p127
      %p208 = pneg %p124
      %p209 = pneg %p148
      %p210 = pneg %p145
      %s211 = smul.u32 32, %s17
      %p212 = scmp.lt.s32.totalorder %s211, 63
      %s213 = scalar_select %p212, %s211, 63
      %s214 = smul.addr %s213, 4
      %s215 = scalar_lea.vmem %s0, %s214
      %s216 = smul.u32 32, %s17
      %s217 = smul.u32 32, %s17
      %p218 = scmp.lt.s32.totalorder %s217, 63
      %s219 = scalar_select %p218, %s217, 63
      %s220 = smul.addr %s219, 8
      %s221 = scalar_lea.vmem %s3, %s220
      %s222 = smul.u32 32, %s17
      %p223 = scmp.eq.s32.totalorder %s17, 0
      // Predicated region
      $region33: #{expansive_block_forward.6} parent=31 // pred_check
        %p224 = pneg %p223
      $region34: #{expansive_block_forward.6} parent=31 // pred_check_branch
        %226 = sbr.rel (%p224) target = $region36
      $region35: #{expansive_block_forward.6} parent=31 // pred_region
        %227 = vst [vmem:[%s4] sm:$0x1] 0.0
        %228 = vst [vmem:[%s5] sm:$0x1] 0.0
      $region36: #{expansive_block_forward.6} parent=31 // pred_fallthru
        _
      %v229 = vld [vmem:[%s215] sm:$0xf]
      %v230 = vld [vmem:[%s215 + $0x4] sm:$0xf]
      %v231 = vld [vmem:[%s215 + $0x8] sm:$0xf]
      %v232 = vld [vmem:[%s215 + $0xc] sm:$0xf]
      %v233 = vld [vmem:[%s215 + $0x10] sm:$0xf]
      %v234 = vld [vmem:[%s215 + $0x14] sm:$0xf]
      %v235 = vld [vmem:[%s215 + $0x18] sm:$0xf]
      %v236 = vld [vmem:[%s215 + $0x1c] sm:$0xf]
      %v237 = vld [vmem:[%s215 + $0x20] sm:$0xf]
      %v238 = vld [vmem:[%s215 + $0x24] sm:$0xf]
      %v239 = vld [vmem:[%s215 + $0x28] sm:$0xf]
      %v240 = vld [vmem:[%s215 + $0x2c] sm:$0xf]
      %v241 = vld [vmem:[%s215 + $0x30] sm:$0xf]
      %v242 = vld [vmem:[%s215 + $0x34] sm:$0xf]
      %v243 = vld [vmem:[%s215 + $0x38] sm:$0xf]
      %v244 = vld [vmem:[%s215 + $0x3c] sm:$0xf]
      %v245 = vld [vmem:[%s215 + $0x40] sm:$0xf]
      %v246 = vld [vmem:[%s215 + $0x44] sm:$0xf]
      %v247 = vld [vmem:[%s215 + $0x48] sm:$0xf]
      %v248 = vld [vmem:[%s215 + $0x4c] sm:$0xf]
      %v249 = vld [vmem:[%s215 + $0x50] sm:$0xf]
      %v250 = vld [vmem:[%s215 + $0x54] sm:$0xf]
      %v251 = vld [vmem:[%s215 + $0x58] sm:$0xf]
      %v252 = vld [vmem:[%s215 + $0x5c] sm:$0xf]
      %v253 = vld [vmem:[%s215 + $0x60] sm:$0xf]
      %v254 = vld [vmem:[%s215 + $0x64] sm:$0xf]
      %v255 = vld [vmem:[%s215 + $0x68] sm:$0xf]
      %v256 = vld [vmem:[%s215 + $0x6c] sm:$0xf]
      %v257 = vld [vmem:[%s215 + $0x70] sm:$0xf]
      %v258 = vld [vmem:[%s215 + $0x74] sm:$0xf]
      %v259 = vld [vmem:[%s215 + $0x78] sm:$0xf]
      %v260 = vld [vmem:[%s215 + $0x7c] sm:$0xf]
      %v261 = vld [vmem:[%s1] sm:$0xf]
      %v262 = vld [vmem:[%s1 + $0x4] sm:$0xf]
      %v263 = vld [vmem:[%s1 + $0x8] sm:$0xf]
      %v264 = vld [vmem:[%s1 + $0xc] sm:$0xf]
      %v265 = vld [vmem:[%s1 + $0x10] sm:$0xf]
      %v266 = vld [vmem:[%s1 + $0x14] sm:$0xf]
      %v267 = vld [vmem:[%s1 + $0x18] sm:$0xf]
      %v268 = vld [vmem:[%s1 + $0x1c] sm:$0xf]
      %v269 = vld [vmem:[%s1 + $0x20] sm:$0xf]
      %v270 = vld [vmem:[%s1 + $0x24] sm:$0xf]
      %v271 = vld [vmem:[%s1 + $0x28] sm:$0xf]
      %v272 = vld [vmem:[%s1 + $0x2c] sm:$0xf]
      %v273 = vld [vmem:[%s1 + $0x30] sm:$0xf]
      %v274 = vld [vmem:[%s1 + $0x34] sm:$0xf]
      %v275 = vld [vmem:[%s1 + $0x38] sm:$0xf]
      %v276 = vld [vmem:[%s1 + $0x3c] sm:$0xf]
      %v277 = vld [vmem:[%s2] sm:$0x1]
      %v279 = vperm.slane %v277, 0
      %v313 = vunpack.c.l.b16 %v229
      %v314 = vunpack.c.l.b16 %v230
      %v315 = vunpack.c.l.b16 %v231
      %v316 = vunpack.c.l.b16 %v232
      %v317 = vunpack.c.l.b16 %v233
      %v318 = vunpack.c.l.b16 %v234
      %v319 = vunpack.c.l.b16 %v235
      %v320 = vunpack.c.l.b16 %v236
      %v321 = vunpack.c.l.b16 %v237
      %v322 = vunpack.c.l.b16 %v238
      %v323 = vunpack.c.l.b16 %v239
      %v324 = vunpack.c.l.b16 %v240
      %v325 = vunpack.c.l.b16 %v241
      %v326 = vunpack.c.l.b16 %v242
      %v327 = vunpack.c.l.b16 %v243
      %v328 = vunpack.c.l.b16 %v244
      %v329 = vunpack.c.l.b16 %v245
      %v330 = vunpack.c.l.b16 %v246
      %v331 = vunpack.c.l.b16 %v247
      %v332 = vunpack.c.l.b16 %v248
      %v333 = vunpack.c.l.b16 %v249
      %v334 = vunpack.c.l.b16 %v250
      %v335 = vunpack.c.l.b16 %v251
      %v336 = vunpack.c.l.b16 %v252
      %v337 = vunpack.c.l.b16 %v253
      %v338 = vunpack.c.l.b16 %v254
      %v339 = vunpack.c.l.b16 %v255
      %v340 = vunpack.c.l.b16 %v256
      %v341 = vunpack.c.l.b16 %v257
      %v342 = vunpack.c.l.b16 %v258
      %v343 = vunpack.c.l.b16 %v259
      %v344 = vunpack.c.l.b16 %v260
      %v345 = vpack.c.b16 %v314, %v313
      %v346 = vpack.c.b16 %v316, %v315
      %v347 = vpack.c.b16 %v318, %v317
      %v348 = vpack.c.b16 %v320, %v319
      %v349 = vpack.c.b16 %v322, %v321
      %v350 = vpack.c.b16 %v324, %v323
      %v351 = vpack.c.b16 %v326, %v325
      %v352 = vpack.c.b16 %v328, %v327
      %v353 = vpack.c.b16 %v330, %v329
      %v354 = vpack.c.b16 %v332, %v331
      %v355 = vpack.c.b16 %v334, %v333
      %v356 = vpack.c.b16 %v336, %v335
      %v357 = vpack.c.b16 %v338, %v337
      %v358 = vpack.c.b16 %v340, %v339
      %v359 = vpack.c.b16 %v342, %v341
      %v360 = vpack.c.b16 %v344, %v343
      %v393 = vunpack.c.l.b16 %v261
      %v394 = vunpack.c.l.b16 %v262
      %v395 = vunpack.c.l.b16 %v263
      %v396 = vunpack.c.l.b16 %v264
      %v397 = vunpack.c.l.b16 %v265
      %v398 = vunpack.c.l.b16 %v266
      %v399 = vunpack.c.l.b16 %v267
      %v400 = vunpack.c.l.b16 %v268
      %v401 = vunpack.c.l.b16 %v269
      %v402 = vunpack.c.l.b16 %v270
      %v403 = vunpack.c.l.b16 %v271
      %v404 = vunpack.c.l.b16 %v272
      %v405 = vunpack.c.l.b16 %v273
      %v406 = vunpack.c.l.b16 %v274
      %v407 = vunpack.c.l.b16 %v275
      %v408 = vunpack.c.l.b16 %v276
      %v409 = vpack.c.b16 %v394, %v393
      %v410 = vpack.c.b16 %v396, %v395
      %v411 = vpack.c.b16 %v398, %v397
      %v412 = vpack.c.b16 %v400, %v399
      %v413 = vpack.c.b16 %v402, %v401
      %v414 = vpack.c.b16 %v404, %v403
      %v415 = vpack.c.b16 %v406, %v405
      %v416 = vpack.c.b16 %v408, %v407
      %425 = vmatpush.bf16.msra.mxu0 %v416
      %426 = vmatpush.bf16.msra.mxu0 %v415
      %427 = vmatpush.bf16.msra.mxu0 %v414
      %428 = vmatpush.bf16.msra.mxu0 %v413
      %429 = vmatpush.bf16.msra.mxu0 %v412
      %430 = vmatpush.bf16.msra.mxu0 %v411
      %431 = vmatpush.bf16.msra.mxu0 %v410
      %432 = vmatpush.bf16.msra.mxu0 %v409
      %433 = vmatmul.bf16.gmra.mxu0 %v345
      %v434 = vpop.f32.mrf.mxu0
      %v435 = vadd.f32 %v279, %v434
      %v436 = vpop.f32.mrf.mxu0
      %v437 = vadd.f32 %v279, %v436
      %438 = vmatmul.bf16.gmra.mxu0 %v346
      %v439 = vpop.f32.mrf.mxu0
      %v440 = vadd.f32 %v279, %v439
      %v441 = vpop.f32.mrf.mxu0
      %v442 = vadd.f32 %v279, %v441
      %443 = vmatmul.bf16.gmra.mxu0 %v347
      %v444 = vpop.f32.mrf.mxu0
      %v445 = vadd.f32 %v279, %v444
      %v446 = vpop.f32.mrf.mxu0
      %v447 = vadd.f32 %v279, %v446
      %448 = vmatmul.bf16.gmra.mxu0 %v348
      %v449 = vpop.f32.mrf.mxu0
      %v450 = vadd.f32 %v279, %v449
      %v451 = vpop.f32.mrf.mxu0
      %v452 = vadd.f32 %v279, %v451
      %453 = vmatmul.bf16.gmra.mxu0 %v349
      %v454 = vpop.f32.mrf.mxu0
      %v455 = vadd.f32 %v279, %v454
      %v456 = vpop.f32.mrf.mxu0
      %v457 = vadd.f32 %v279, %v456
      %458 = vmatmul.bf16.gmra.mxu0 %v350
      %v459 = vpop.f32.mrf.mxu0
      %v460 = vadd.f32 %v279, %v459
      %v461 = vpop.f32.mrf.mxu0
      %v462 = vadd.f32 %v279, %v461
      %463 = vmatmul.bf16.gmra.mxu0 %v351
      %v464 = vpop.f32.mrf.mxu0
      %v465 = vadd.f32 %v279, %v464
      %v466 = vpop.f32.mrf.mxu0
      %v467 = vadd.f32 %v279, %v466
      %468 = vmatmul.bf16.gmra.mxu0 %v352
      %v469 = vpop.f32.mrf.mxu0
      %v470 = vadd.f32 %v279, %v469
      %v471 = vpop.f32.mrf.mxu0
      %v472 = vadd.f32 %v279, %v471
      %473 = vmatmul.bf16.gmra.mxu0 %v353
      %v474 = vpop.f32.mrf.mxu0
      %v475 = vadd.f32 %v279, %v474
      %v476 = vpop.f32.mrf.mxu0
      %v477 = vadd.f32 %v279, %v476
      %478 = vmatmul.bf16.gmra.mxu0 %v354
      %v479 = vpop.f32.mrf.mxu0
      %v480 = vadd.f32 %v279, %v479
      %v481 = vpop.f32.mrf.mxu0
      %v482 = vadd.f32 %v279, %v481
      %483 = vmatmul.bf16.gmra.mxu0 %v355
      %v484 = vpop.f32.mrf.mxu0
      %v485 = vadd.f32 %v279, %v484
      %v486 = vpop.f32.mrf.mxu0
      %v487 = vadd.f32 %v279, %v486
      %488 = vmatmul.bf16.gmra.mxu0 %v356
      %v489 = vpop.f32.mrf.mxu0
      %v490 = vadd.f32 %v279, %v489
      %v491 = vpop.f32.mrf.mxu0
      %v492 = vadd.f32 %v279, %v491
      %493 = vmatmul.bf16.gmra.mxu0 %v357
      %v494 = vpop.f32.mrf.mxu0
      %v495 = vadd.f32 %v279, %v494
      %v496 = vpop.f32.mrf.mxu0
      %v497 = vadd.f32 %v279, %v496
      %498 = vmatmul.bf16.gmra.mxu0 %v358
      %v499 = vpop.f32.mrf.mxu0
      %v500 = vadd.f32 %v279, %v499
      %v501 = vpop.f32.mrf.mxu0
      %v502 = vadd.f32 %v279, %v501
      %503 = vmatmul.bf16.gmra.mxu0 %v359
      %v504 = vpop.f32.mrf.mxu0
      %v505 = vadd.f32 %v279, %v504
      %v506 = vpop.f32.mrf.mxu0
      %v507 = vadd.f32 %v279, %v506
      %508 = vmatmul.bf16.gmra.mxu0 %v360
      %v509 = vpop.f32.mrf.mxu0
      %v510 = vadd.f32 %v279, %v509
      %v511 = vpop.f32.mrf.mxu0
      %v512 = vadd.f32 %v279, %v511
      %513 = vdwg.mxu0
      %v514 = vmax.f32 %v435, 0.0
      %v515 = vmax.f32 %v437, 0.0
      %v516 = vmax.f32 %v440, 0.0
      %v517 = vmax.f32 %v442, 0.0
      %v518 = vmax.f32 %v445, 0.0
      %v519 = vmax.f32 %v447, 0.0
      %v520 = vmax.f32 %v450, 0.0
      %v521 = vmax.f32 %v452, 0.0
      %v522 = vmax.f32 %v455, 0.0
      %v523 = vmax.f32 %v457, 0.0
      %v524 = vmax.f32 %v460, 0.0
      %v525 = vmax.f32 %v462, 0.0
      %v526 = vmax.f32 %v465, 0.0
      %v527 = vmax.f32 %v467, 0.0
      %v528 = vmax.f32 %v470, 0.0
      %v529 = vmax.f32 %v472, 0.0
      %v530 = vmax.f32 %v475, 0.0
      %v531 = vmax.f32 %v477, 0.0
      %v532 = vmax.f32 %v480, 0.0
      %v533 = vmax.f32 %v482, 0.0
      %v534 = vmax.f32 %v485, 0.0
      %v535 = vmax.f32 %v487, 0.0
      %v536 = vmax.f32 %v490, 0.0
      %v537 = vmax.f32 %v492, 0.0
      %v538 = vmax.f32 %v495, 0.0
      %v539 = vmax.f32 %v497, 0.0
      %v540 = vmax.f32 %v500, 0.0
      %v541 = vmax.f32 %v502, 0.0
      %v542 = vmax.f32 %v505, 0.0
      %v543 = vmax.f32 %v507, 0.0
      %v544 = vmax.f32 %v510, 0.0
      %v545 = vmax.f32 %v512, 0.0
      %546 = vst [vmem:[%s221] sm:$0xff] %v514
      %547 = vst [vmem:[%s221 + $0x8] sm:$0xff] %v515
      %548 = vst [vmem:[%s221 + $0x10] sm:$0xff] %v516
      %549 = vst [vmem:[%s221 + $0x18] sm:$0xff] %v517
      %550 = vst [vmem:[%s221 + $0x20] sm:$0xff] %v518
      %551 = vst [vmem:[%s221 + $0x28] sm:$0xff] %v519
      %552 = vst [vmem:[%s221 + $0x30] sm:$0xff] %v520
      %553 = vst [vmem:[%s221 + $0x38] sm:$0xff] %v521
      %554 = vst [vmem:[%s221 + $0x40] sm:$0xff] %v522
      %555 = vst [vmem:[%s221 + $0x48] sm:$0xff] %v523
      %556 = vst [vmem:[%s221 + $0x50] sm:$0xff] %v524
      %557 = vst [vmem:[%s221 + $0x58] sm:$0xff] %v525
      %558 = vst [vmem:[%s221 + $0x60] sm:$0xff] %v526
      %559 = vst [vmem:[%s221 + $0x68] sm:$0xff] %v527
      %560 = vst [vmem:[%s221 + $0x70] sm:$0xff] %v528
      %561 = vst [vmem:[%s221 + $0x78] sm:$0xff] %v529
      %562 = vst [vmem:[%s221 + $0x80] sm:$0xff] %v530
      %563 = vst [vmem:[%s221 + $0x88] sm:$0xff] %v531
      %564 = vst [vmem:[%s221 + $0x90] sm:$0xff] %v532
      %565 = vst [vmem:[%s221 + $0x98] sm:$0xff] %v533
      %566 = vst [vmem:[%s221 + $0xa0] sm:$0xff] %v534
      %567 = vst [vmem:[%s221 + $0xa8] sm:$0xff] %v535
      %568 = vst [vmem:[%s221 + $0xb0] sm:$0xff] %v536
      %569 = vst [vmem:[%s221 + $0xb8] sm:$0xff] %v537
      %570 = vst [vmem:[%s221 + $0xc0] sm:$0xff] %v538
      %571 = vst [vmem:[%s221 + $0xc8] sm:$0xff] %v539
      %572 = vst [vmem:[%s221 + $0xd0] sm:$0xff] %v540
      %573 = vst [vmem:[%s221 + $0xd8] sm:$0xff] %v541
      %574 = vst [vmem:[%s221 + $0xe0] sm:$0xff] %v542
      %575 = vst [vmem:[%s221 + $0xe8] sm:$0xff] %v543
      %576 = vst [vmem:[%s221 + $0xf0] sm:$0xff] %v544
      %577 = vst [vmem:[%s221 + $0xf8] sm:$0xff] %v545
      %s578 = smul.u32 %s17, 256
      %v579 = vlaneseq
      %v580 = vshrl.u32 %v579, 7
      %v581 = vadd.s32 %v580, 8
      %v582 = vadd.s32 %v580, 16
      %v583 = vadd.s32 %v580, 24
      %v584 = vadd.s32 %v580, 32
      %v585 = vadd.s32 %v580, 40
      %v586 = vadd.s32 %v580, 48
      %v587 = vadd.s32 %v580, 56
      %v588 = vadd.s32 %v580, 64
      %v589 = vadd.s32 %v580, 72
      %v590 = vadd.s32 %v580, 80
      %v591 = vadd.s32 %v580, 88
      %v592 = vadd.s32 %v580, 96
      %v593 = vadd.s32 %v580, 104
      %v594 = vadd.s32 %v580, 112
      %v595 = vadd.s32 %v580, 120
      %v596 = vadd.s32 %v580, 128
      %v597 = vadd.s32 %v580, 136
      %v598 = vadd.s32 %v580, 144
      %v599 = vadd.s32 %v580, 152
      %v600 = vadd.s32 %v580, 160
      %v601 = vadd.s32 %v580, 168
      %v602 = vadd.s32 %v580, 176
      %v603 = vadd.s32 %v580, 184
      %v604 = vadd.s32 %v580, 192
      %v605 = vadd.s32 %v580, 200
      %v606 = vadd.s32 %v580, 208
      %v607 = vadd.s32 %v580, 216
      %v608 = vadd.s32 %v580, 224
      %v609 = vadd.s32 %v580, 232
      %v610 = vadd.s32 %v580, 240
      %v611 = vadd.s32 %v580, 248
      %v612 = vstv %s578
      %v613 = vadd.s32 %v612, %v580
      %v614 = vadd.s32 %v612, %v581
      %v615 = vadd.s32 %v612, %v582
      %v616 = vadd.s32 %v612, %v583
      %v617 = vadd.s32 %v612, %v584
      %v618 = vadd.s32 %v612, %v585
      %v619 = vadd.s32 %v612, %v586
      %v620 = vadd.s32 %v612, %v587
      %v621 = vadd.s32 %v612, %v588
      %v622 = vadd.s32 %v612, %v589
      %v623 = vadd.s32 %v612, %v590
      %v624 = vadd.s32 %v612, %v591
      %v625 = vadd.s32 %v612, %v592
      %v626 = vadd.s32 %v612, %v593
      %v627 = vadd.s32 %v612, %v594
      %v628 = vadd.s32 %v612, %v595
      %v629 = vadd.s32 %v612, %v596
      %v630 = vadd.s32 %v612, %v597
      %v631 = vadd.s32 %v612, %v598
      %v632 = vadd.s32 %v612, %v599
      %v633 = vadd.s32 %v612, %v600
      %v634 = vadd.s32 %v612, %v601
      %v635 = vadd.s32 %v612, %v602
      %v636 = vadd.s32 %v612, %v603
      %v637 = vadd.s32 %v612, %v604
      %v638 = vadd.s32 %v612, %v605
      %v639 = vadd.s32 %v612, %v606
      %v640 = vadd.s32 %v612, %v607
      %v641 = vadd.s32 %v612, %v608
      %v642 = vadd.s32 %v612, %v609
      %v643 = vadd.s32 %v612, %v610
      %v644 = vadd.s32 %v612, %v611
      %vm645 = vcmp.lt.s32.totalorder %v613, 392
      %vm646 = vcmp.lt.s32.totalorder %v614, 392
      %vm647 = vcmp.lt.s32.totalorder %v615, 392
      %vm648 = vcmp.lt.s32.totalorder %v616, 392
      %vm649 = vcmp.lt.s32.totalorder %v617, 392
      %vm650 = vcmp.lt.s32.totalorder %v618, 392
      %vm651 = vcmp.lt.s32.totalorder %v619, 392
      %vm652 = vcmp.lt.s32.totalorder %v620, 392
      %vm653 = vcmp.lt.s32.totalorder %v621, 392
      %vm654 = vcmp.lt.s32.totalorder %v622, 392
      %vm655 = vcmp.lt.s32.totalorder %v623, 392
      %vm656 = vcmp.lt.s32.totalorder %v624, 392
      %vm657 = vcmp.lt.s32.totalorder %v625, 392
      %vm658 = vcmp.lt.s32.totalorder %v626, 392
      %vm659 = vcmp.lt.s32.totalorder %v627, 392
      %vm660 = vcmp.lt.s32.totalorder %v628, 392
      %vm661 = vcmp.lt.s32.totalorder %v629, 392
      %vm662 = vcmp.lt.s32.totalorder %v630, 392
      %vm663 = vcmp.lt.s32.totalorder %v631, 392
      %vm664 = vcmp.lt.s32.totalorder %v632, 392
      %vm665 = vcmp.lt.s32.totalorder %v633, 392
      %vm666 = vcmp.lt.s32.totalorder %v634, 392
      %vm667 = vcmp.lt.s32.totalorder %v635, 392
      %vm668 = vcmp.lt.s32.totalorder %v636, 392
      %vm669 = vcmp.lt.s32.totalorder %v637, 392
      %vm670 = vcmp.lt.s32.totalorder %v638, 392
      %vm671 = vcmp.lt.s32.totalorder %v639, 392
      %vm672 = vcmp.lt.s32.totalorder %v640, 392
      %vm673 = vcmp.lt.s32.totalorder %v641, 392
      %vm674 = vcmp.lt.s32.totalorder %v642, 392
      %vm675 = vcmp.lt.s32.totalorder %v643, 392
      %vm676 = vcmp.lt.s32.totalorder %v644, 392
      %v677 = vsel %vm645, 1, 0
      %v678 = vsel %vm646, 1, 0
      %v679 = vsel %vm647, 1, 0
      %v680 = vsel %vm648, 1, 0
      %v681 = vsel %vm649, 1, 0
      %v682 = vsel %vm650, 1, 0
      %v683 = vsel %vm651, 1, 0
      %v684 = vsel %vm652, 1, 0
      %v685 = vsel %vm653, 1, 0
      %v686 = vsel %vm654, 1, 0
      %v687 = vsel %vm655, 1, 0
      %v688 = vsel %vm656, 1, 0
      %v689 = vsel %vm657, 1, 0
      %v690 = vsel %vm658, 1, 0
      %v691 = vsel %vm659, 1, 0
      %v692 = vsel %vm660, 1, 0
      %v693 = vsel %vm661, 1, 0
      %v694 = vsel %vm662, 1, 0
      %v695 = vsel %vm663, 1, 0
      %v696 = vsel %vm664, 1, 0
      %v697 = vsel %vm665, 1, 0
      %v698 = vsel %vm666, 1, 0
      %v699 = vsel %vm667, 1, 0
      %v700 = vsel %vm668, 1, 0
      %v701 = vsel %vm669, 1, 0
      %v702 = vsel %vm670, 1, 0
      %v703 = vsel %vm671, 1, 0
      %v704 = vsel %vm672, 1, 0
      %v705 = vsel %vm673, 1, 0
      %v706 = vsel %vm674, 1, 0
      %v707 = vsel %vm675, 1, 0
      %v708 = vsel %vm676, 1, 0
      %v709 = vcvt.s32.f32 %v677
      %v710 = vcvt.s32.f32 %v678
      %v711 = vcvt.s32.f32 %v679
      %v712 = vcvt.s32.f32 %v680
      %v713 = vcvt.s32.f32 %v681
      %v714 = vcvt.s32.f32 %v682
      %v715 = vcvt.s32.f32 %v683
      %v716 = vcvt.s32.f32 %v684
      %v717 = vcvt.s32.f32 %v685
      %v718 = vcvt.s32.f32 %v686
      %v719 = vcvt.s32.f32 %v687
      %v720 = vcvt.s32.f32 %v688
      %v721 = vcvt.s32.f32 %v689
      %v722 = vcvt.s32.f32 %v690
      %v723 = vcvt.s32.f32 %v691
      %v724 = vcvt.s32.f32 %v692
      %v725 = vcvt.s32.f32 %v693
      %v726 = vcvt.s32.f32 %v694
      %v727 = vcvt.s32.f32 %v695
      %v728 = vcvt.s32.f32 %v696
      %v729 = vcvt.s32.f32 %v697
      %v730 = vcvt.s32.f32 %v698
      %v731 = vcvt.s32.f32 %v699
      %v732 = vcvt.s32.f32 %v700
      %v733 = vcvt.s32.f32 %v701
      %v734 = vcvt.s32.f32 %v702
      %v735 = vcvt.s32.f32 %v703
      %v736 = vcvt.s32.f32 %v704
      %v737 = vcvt.s32.f32 %v705
      %v738 = vcvt.s32.f32 %v706
      %v739 = vcvt.s32.f32 %v707
      %v740 = vcvt.s32.f32 %v708
      %v741 = vmul.f32 %v514, %v709
      %v742 = vmul.f32 %v515, %v710
      %v743 = vmul.f32 %v516, %v711
      %v744 = vmul.f32 %v517, %v712
      %v745 = vmul.f32 %v518, %v713
      %v746 = vmul.f32 %v519, %v714
      %v747 = vmul.f32 %v520, %v715
      %v748 = vmul.f32 %v521, %v716
      %v749 = vmul.f32 %v522, %v717
      %v750 = vmul.f32 %v523, %v718
      %v751 = vmul.f32 %v524, %v719
      %v752 = vmul.f32 %v525, %v720
      %v753 = vmul.f32 %v526, %v721
      %v754 = vmul.f32 %v527, %v722
      %v755 = vmul.f32 %v528, %v723
      %v756 = vmul.f32 %v529, %v724
      %v757 = vmul.f32 %v530, %v725
      %v758 = vmul.f32 %v531, %v726
      %v759 = vmul.f32 %v532, %v727
      %v760 = vmul.f32 %v533, %v728
      %v761 = vmul.f32 %v534, %v729
      %v762 = vmul.f32 %v535, %v730
      %v763 = vmul.f32 %v536, %v731
      %v764 = vmul.f32 %v537, %v732
      %v765 = vmul.f32 %v538, %v733
      %v766 = vmul.f32 %v539, %v734
      %v767 = vmul.f32 %v540, %v735
      %v768 = vmul.f32 %v541, %v736
      %v769 = vmul.f32 %v542, %v737
      %v770 = vmul.f32 %v543, %v738
      %v771 = vmul.f32 %v544, %v739
      %v772 = vmul.f32 %v545, %v740
      %v773 = vld [vmem:[%s4] sm:$0x1]
      %v774 = vadd.f32 %v741, %v742
      %v775 = vadd.f32 %v774, %v743
      %v776 = vadd.f32 %v775, %v744
      %v777 = vadd.f32 %v776, %v745
      %v778 = vadd.f32 %v777, %v746
      %v779 = vadd.f32 %v778, %v747
      %v780 = vadd.f32 %v779, %v748
      %v781 = vadd.f32 %v780, %v749
      %v782 = vadd.f32 %v781, %v750
      %v783 = vadd.f32 %v782, %v751
      %v784 = vadd.f32 %v783, %v752
      %v785 = vadd.f32 %v784, %v753
      %v786 = vadd.f32 %v785, %v754
      %v787 = vadd.f32 %v786, %v755
      %v788 = vadd.f32 %v787, %v756
      %v789 = vadd.f32 %v788, %v757
      %v790 = vadd.f32 %v789, %v758
      %v791 = vadd.f32 %v790, %v759
      %v792 = vadd.f32 %v791, %v760
      %v793 = vadd.f32 %v792, %v761
      %v794 = vadd.f32 %v793, %v762
      %v795 = vadd.f32 %v794, %v763
      %v796 = vadd.f32 %v795, %v764
      %v797 = vadd.f32 %v796, %v765
      %v798 = vadd.f32 %v797, %v766
      %v799 = vadd.f32 %v798, %v767
      %v800 = vadd.f32 %v799, %v768
      %v801 = vadd.f32 %v800, %v769
      %v802 = vadd.f32 %v801, %v770
      %v803 = vadd.f32 %v802, %v771
      %v804 = vadd.f32 %v803, %v772
      %v805 = vrot.slane %v804, 4
      %v806 = vadd.f32 %v804, %v805
      %v807 = vrot.slane %v806, 2
      %v808 = vadd.f32 %v806, %v807
      %v809 = vrot.slane %v808, 1
      %v810 = vadd.f32 %v808, %v809
      %v811 = vadd.f32 %v773, %v810
      %812 = vst [vmem:[%s4] sm:$0x1] %v811
      %v813 = vld [vmem:[%s5] sm:$0x1]
      %v814 = vmul.f32 %v741, %v741
      %v815 = vmul.f32 %v742, %v742
      %v816 = vmul.f32 %v743, %v743
      %v817 = vmul.f32 %v744, %v744
      %v818 = vmul.f32 %v745, %v745
      %v819 = vmul.f32 %v746, %v746
      %v820 = vmul.f32 %v747, %v747
      %v821 = vmul.f32 %v748, %v748
      %v822 = vmul.f32 %v749, %v749
      %v823 = vmul.f32 %v750, %v750
      %v824 = vmul.f32 %v751, %v751
      %v825 = vmul.f32 %v752, %v752
      %v826 = vmul.f32 %v753, %v753
      %v827 = vmul.f32 %v754, %v754
      %v828 = vmul.f32 %v755, %v755
      %v829 = vmul.f32 %v756, %v756
      %v830 = vmul.f32 %v757, %v757
      %v831 = vmul.f32 %v758, %v758
      %v832 = vmul.f32 %v759, %v759
      %v833 = vmul.f32 %v760, %v760
      %v834 = vmul.f32 %v761, %v761
      %v835 = vmul.f32 %v762, %v762
      %v836 = vmul.f32 %v763, %v763
      %v837 = vmul.f32 %v764, %v764
      %v838 = vmul.f32 %v765, %v765
      %v839 = vmul.f32 %v766, %v766
      %v840 = vmul.f32 %v767, %v767
      %v841 = vmul.f32 %v768, %v768
      %v842 = vmul.f32 %v769, %v769
      %v843 = vmul.f32 %v770, %v770
      %v844 = vmul.f32 %v771, %v771
      %v845 = vmul.f32 %v772, %v772
      %v846 = vadd.f32 %v814, %v815
      %v847 = vadd.f32 %v846, %v816
      %v848 = vadd.f32 %v847, %v817
      %v849 = vadd.f32 %v848, %v818
      %v850 = vadd.f32 %v849, %v819
      %v851 = vadd.f32 %v850, %v820
      %v852 = vadd.f32 %v851, %v821
      %v853 = vadd.f32 %v852, %v822
      %v854 = vadd.f32 %v853, %v823
      %v855 = vadd.f32 %v854, %v824
      %v856 = vadd.f32 %v855, %v825
      %v857 = vadd.f32 %v856, %v826
      %v858 = vadd.f32 %v857, %v827
      %v859 = vadd.f32 %v858, %v828
      %v860 = vadd.f32 %v859, %v829
      %v861 = vadd.f32 %v860, %v830
      %v862 = vadd.f32 %v861, %v831
      %v863 = vadd.f32 %v862, %v832
      %v864 = vadd.f32 %v863, %v833
      %v865 = vadd.f32 %v864, %v834
      %v866 = vadd.f32 %v865, %v835
      %v867 = vadd.f32 %v866, %v836
      %v868 = vadd.f32 %v867, %v837
      %v869 = vadd.f32 %v868, %v838
      %v870 = vadd.f32 %v869, %v839
      %v871 = vadd.f32 %v870, %v840
      %v872 = vadd.f32 %v871, %v841
      %v873 = vadd.f32 %v872, %v842
      %v874 = vadd.f32 %v873, %v843
      %v875 = vadd.f32 %v874, %v844
      %v876 = vadd.f32 %v875, %v845
      %v877 = vrot.slane %v876, 4
      %v878 = vadd.f32 %v876, %v877
      %v879 = vrot.slane %v878, 2
      %v880 = vadd.f32 %v878, %v879
      %v881 = vrot.slane %v880, 1
      %v882 = vadd.f32 %v880, %v881
      %v883 = vadd.f32 %v813, %v882
      %884 = vst [vmem:[%s5] sm:$0x1] %v883
      %s885 = smul.u32 32, %s17
      %p886 = scmp.lt.s32.totalorder %s885, 63
      %s887 = scalar_select %p886, %s885, 63
      %s888 = smul.addr %s887, 8
      %s889 = scalar_lea.vmem %s3, %s888
      // Predicated region
      $region37: #{expansive_block_forward.6} parent=31 // pred_check
        %p890 = pneg %p103
      $region38: #{expansive_block_forward.6} parent=31 // pred_check_branch
        %892 = sbr.rel (%p890) target = $region40
      $region39: #{expansive_block_forward.6} parent=31 // pred_region
        %s893 = smul.u32 32, %s17
      $region40: #{expansive_block_forward.6} parent=31 // pred_fallthru
        _
      // Predicated region
      $region41: #{expansive_block_forward.6} parent=31 // pred_check
        %p894 = pneg %p124
      $region42: #{expansive_block_forward.6} parent=31 // pred_check_branch
        %896 = sbr.rel (%p894) target = $region44
      $region43: #{expansive_block_forward.6} parent=31 // pred_region
        _
      $region44: #{expansive_block_forward.6} parent=31 // pred_fallthru
        _
      // Predicated region
      $region45: #{expansive_block_forward.6} parent=31 // pred_check
        %p897 = pneg %p145
      $region46: #{expansive_block_forward.6} parent=31 // pred_check_branch
        %899 = sbr.rel (%p897) target = $region48
      $region47: #{expansive_block_forward.6} parent=31 // pred_region
        _
      $region48: #{expansive_block_forward.6} parent=31 // pred_fallthru
        _
      // Predicated region
      $region49: #{expansive_block_forward.6} parent=31 // pred_check
        %p900 = pneg %p124
      $region50: #{expansive_block_forward.6} parent=31 // pred_check_branch
        %902 = sbr.rel (%p900) target = $region52
      $region51: #{expansive_block_forward.6} parent=31 // pred_region
        _
      $region52: #{expansive_block_forward.6} parent=31 // pred_fallthru
        _
      // Predicated region
      $region53: #{expansive_block_forward.6} parent=31 // pred_check
        %p903 = pneg %p145
      $region54: #{expansive_block_forward.6} parent=31 // pred_check_branch
        %905 = sbr.rel (%p903) target = $region56
      $region55: #{expansive_block_forward.6} parent=31 // pred_region
        _
      $region56: #{expansive_block_forward.6} parent=31 // pred_fallthru
        _
    $region32: #{expansive_block_forward.6} parent=5 // pred_fallthru
      _
    %p906 = scmp.le.s32.totalorder 2, %s12
    // Predicated region
    $region57: #{expansive_block_forward.6} parent=5 // pred_check
      %p907 = pneg %p906
    $region58: #{expansive_block_forward.6} parent=5 // pred_check_branch
      %909 = sbr.rel (%p907) target = $region60
    $region59: #{expansive_block_forward.6} parent=5 // pred_region
      %s910 = ssub.s32 %s12, 2
      // Predicated region
      $region61: #{expansive_block_forward.6} parent=59 // pred_check
        %p911 = pneg %p109
      $region62: #{expansive_block_forward.6} parent=59 // pred_check_branch
        %913 = sbr.rel (%p911) target = $region64
      $region63: #{expansive_block_forward.6} parent=59 // pred_region
        %s914 = smul.u32 32, %s18
        %p915 = scmp.lt.s32.totalorder %s914, 63
        %s916 = scalar_select %p915, %s914, 63
        %s917 = smul.addr %s916, 8
        %s918 = scalar_lea.vmem %s3, %s917
      $region64: #{expansive_block_forward.6} parent=59 // pred_fallthru
        _
    $region60: #{expansive_block_forward.6} parent=5 // pred_fallthru
      _
  $region6: #{expansive_block_forward.6} parent=0 // loop_footer
    %s16 = sadd.s32 1, %s12
  $region7: #{expansive_block_forward.6} parent=0 // loop_footer_branch
    %11 = sbr.rel target = $region3
  $region8: #{expansive_block_forward.6} parent=0 // loop_exit
    _

// kernel: expansive_block_forward.8
$region0: #{expansive_block_forward.8}
  #allocation0 [shape = 'u32[]', space=smem, size = 0x4, offset = 0x4, fixed_abs, tag = 'smem constant byte address 0x4 - core index']
  #allocation1 [shape = 'u32[72,128]{1,0:T(1,128)}', space=vmem, size = 0x9000, scoped, tag = 'internal scratch']
  %s0 = inlined_call_operand.vmem [shape: bf16[512,128], index: 0, kind: input, shape index: {}]
  %s1 = inlined_call_operand.vmem [shape: bf16[128,128], index: 1, kind: input, shape index: {}]
  %s2 = inlined_call_operand.vmem [shape: f32[1,128], index: 2, kind: input, shape index: {}]
  %s3 = inlined_call_operand.vmem [shape: f32[512,128], index: 3, kind: output, shape index: {0}]
  %s4 = inlined_call_operand.vmem [shape: f32[1,128], index: 4, kind: output, shape index: {1}]
  %s5 = inlined_call_operand.vmem [shape: f32[1,128], index: 5, kind: output, shape index: {2}]
  %6 = xla_tuple %s3, %s4, %s5
  %s7 = sld [smem:[#allocation0]]
  $region65: #{expansive_block_forward.8} parent=0
    _
  %s9 = ssub.s32 1, %s7
  %s10 = scalar_select 0, %s9, %s7
  loop: start=0, step=1, limit=4
  $region2: #{expansive_block_forward.8} parent=0 // loop_pre_header
    _
  $region3: #{expansive_block_forward.8} parent=0 // loop_header
    %s12 = sphi 0, %s16
    %p13 = scmp.ge.s32.totalorder %s12, 4
    %s22 = sphi 0, %s24
    %s25 = sphi 0, %s22
    %s26 = sphi 0, %s25
    %s42 = sphi 0, %s26
    %s46 = sphi 0, %s46
    %s48 = sphi 0, %s46
    %s49 = sphi 0, %s48
    %s63 = sphi 0, %s49
    %s67 = sphi 0, %s67
    %s69 = sphi 0, %s67
    %s70 = sphi 0, %s69
    %s84 = sphi 0, %s70
    %s90 = sphi 0, %s92
    %s93 = sphi 0, %s90
    %s94 = sphi 0, %s93
    %s110 = sphi 0, %s94
    %s114 = sphi 0, %s114
    %s116 = sphi 0, %s114
    %s117 = sphi 0, %s116
    %s131 = sphi 0, %s117
    %s135 = sphi 0, %s135
    %s137 = sphi 0, %s135
    %s138 = sphi 0, %s137
    %s152 = sphi 0, %s138
  $region4: #{expansive_block_forward.8} parent=0 // loop_header_branch
    %15 = sbr.rel (%p13) target = $region8
  $region5: #{expansive_block_forward.8} parent=0 // loop_body
    %s17 = ssub.s32 %s12, 1
    %s18 = ssub.s32 %s12, 2
    %s19 = sadd.s32 %s12, 1
    %s20 = ssub.s32 %s12, %s19
    %p21 = scmp.eq.s32.totalorder %s20, 0
    %s23 = sadd.s32 %s22, 1
    %s24 = scalar_select %p21, %s22, %s23
    %p27 = pneg %p21
    %p28 = scmp.eq.s32.totalorder %s12, 1
    %p29 = por %p27, %p28
    %p30 = scmp.ne.s32.totalorder %s22, %s25
    %p31 = scmp.eq.s32.totalorder %s12, 0
    %p32 = por %p30, %p31
    %p33 = scmp.ne.s32.totalorder %s22, %s25
    %p34 = scmp.eq.s32.totalorder %s17, 1
    %p35 = por %p33, %p34
    %p36 = scmp.ne.s32.totalorder %s25, %s26
    %p37 = scmp.eq.s32.totalorder %s17, 0
    %p38 = por %p36, %p37
    %p39 = scmp.ne.s32.totalorder %s25, %s26
    %p40 = scmp.eq.s32.totalorder %s18, 1
    %p41 = por %p39, %p40
    %p43 = scmp.ne.s32.totalorder %s26, %s42
    %p44 = scmp.eq.s32.totalorder %s18, 0
    %p45 = por %p43, %p44
    %s47 = sadd.s32 %s46, 1
    %p50 = scmp.eq.s32.totalorder %s12, 1
    %p51 = scmp.ne.s32.totalorder %s46, %s48
    %p52 = scmp.eq.s32.totalorder %s12, 0
    %p53 = por %p51, %p52
    %p54 = scmp.ne.s32.totalorder %s46, %s48
    %p55 = scmp.eq.s32.totalorder %s17, 1
    %p56 = por %p54, %p55
    %p57 = scmp.ne.s32.totalorder %s48, %s49
    %p58 = scmp.eq.s32.totalorder %s17, 0
    %p59 = por %p57, %p58
    %p60 = scmp.ne.s32.totalorder %s48, %s49
    %p61 = scmp.eq.s32.totalorder %s18, 1
    %p62 = por %p60, %p61
    %p64 = scmp.ne.s32.totalorder %s49, %s63
    %p65 = scmp.eq.s32.totalorder %s18, 0
    %p66 = por %p64, %p65
    %s68 = sadd.s32 %s67, 1
    %p71 = scmp.eq.s32.totalorder %s12, 1
    %p72 = scmp.ne.s32.totalorder %s67, %s69
    %p73 = scmp.eq.s32.totalorder %s12, 0
    %p74 = por %p72, %p73
    %p75 = scmp.ne.s32.totalorder %s67, %s69
    %p76 = scmp.eq.s32.totalorder %s17, 1
    %p77 = por %p75, %p76
    %p78 = scmp.ne.s32.totalorder %s69, %s70
    %p79 = scmp.eq.s32.totalorder %s17, 0
    %p80 = por %p78, %p79
    %p81 = scmp.ne.s32.totalorder %s69, %s70
    %p82 = scmp.eq.s32.totalorder %s18, 1
    %p83 = por %p81, %p82
    %p85 = scmp.ne.s32.totalorder %s70, %s84
    %p86 = scmp.eq.s32.totalorder %s18, 0
    %p87 = por %p85, %p86
    %s88 = ssub.s32 %s12, %s19
    %p89 = scmp.eq.s32.totalorder %s88, 0
    %s91 = sadd.s32 %s90, 1
    %s92 = scalar_select %p89, %s90, %s91
    %p95 = pneg %p89
    %p96 = scmp.eq.s32.totalorder %s12, 1
    %p97 = por %p95, %p96
    %p98 = scmp.ne.s32.totalorder %s90, %s93
    %p99 = scmp.eq.s32.totalorder %s12, 0
    %p100 = por %p98, %p99
    %p101 = scmp.ne.s32.totalorder %s90, %s93
    %p102 = scmp.eq.s32.totalorder %s17, 1
    %p103 = por %p101, %p102
    %p104 = scmp.ne.s32.totalorder %s93, %s94
    %p105 = scmp.eq.s32.totalorder %s17, 0
    %p106 = por %p104, %p105
    %p107 = scmp.ne.s32.totalorder %s93, %s94
    %p108 = scmp.eq.s32.totalorder %s18, 1
    %p109 = por %p107, %p108
    %p111 = scmp.ne.s32.totalorder %s94, %s110
    %p112 = scmp.eq.s32.totalorder %s18, 0
    %p113 = por %p111, %p112
    %s115 = sadd.s32 %s114, 1
    %p118 = scmp.eq.s32.totalorder %s12, 1
    %p119 = scmp.ne.s32.totalorder %s114, %s116
    %p120 = scmp.eq.s32.totalorder %s12, 0
    %p121 = por %p119, %p120
    %p122 = scmp.ne.s32.totalorder %s114, %s116
    %p123 = scmp.eq.s32.totalorder %s17, 1
    %p124 = por %p122, %p123
    %p125 = scmp.ne.s32.totalorder %s116, %s117
    %p126 = scmp.eq.s32.totalorder %s17, 0
    %p127 = por %p125, %p126
    %p128 = scmp.ne.s32.totalorder %s116, %s117
    %p129 = scmp.eq.s32.totalorder %s18, 1
    %p130 = por %p128, %p129
    %p132 = scmp.ne.s32.totalorder %s117, %s131
    %p133 = scmp.eq.s32.totalorder %s18, 0
    %p134 = por %p132, %p133
    %s136 = sadd.s32 %s135, 1
    %p139 = scmp.eq.s32.totalorder %s12, 1
    %p140 = scmp.ne.s32.totalorder %s135, %s137
    %p141 = scmp.eq.s32.totalorder %s12, 0
    %p142 = por %p140, %p141
    %p143 = scmp.ne.s32.totalorder %s135, %s137
    %p144 = scmp.eq.s32.totalorder %s17, 1
    %p145 = por %p143, %p144
    %p146 = scmp.ne.s32.totalorder %s137, %s138
    %p147 = scmp.eq.s32.totalorder %s17, 0
    %p148 = por %p146, %p147
    %p149 = scmp.ne.s32.totalorder %s137, %s138
    %p150 = scmp.eq.s32.totalorder %s18, 1
    %p151 = por %p149, %p150
    %p153 = scmp.ne.s32.totalorder %s138, %s152
    %p154 = scmp.eq.s32.totalorder %s18, 0
    %p155 = por %p153, %p154
    %p156 = scmp.le.s32.totalorder 1, %s12
    %p157 = scmp.lt.s32.totalorder %s12, 3
    %p158 = pnand %p156, %p157
    %p159 = pneg %p158
    // Predicated region
    $region9: #{expansive_block_forward.8} parent=5 // pred_check
      _
    $region10: #{expansive_block_forward.8} parent=5 // pred_check_branch
      %161 = sbr.rel (%p158) target = $region12
    $region11: #{expansive_block_forward.8} parent=5 // pred_region
      %s162 = ssub.s32 %s12, 1
      // Predicated region
      $region13: #{expansive_block_forward.8} parent=11 // pred_check
        %p163 = pneg %p59
      $region14: #{expansive_block_forward.8} parent=11 // pred_check_branch
        %165 = sbr.rel (%p163) target = $region16
      $region15: #{expansive_block_forward.8} parent=11 // pred_region
        _
      $region16: #{expansive_block_forward.8} parent=11 // pred_fallthru
        _
      // Predicated region
      $region17: #{expansive_block_forward.8} parent=11 // pred_check
        %p166 = pneg %p80
      $region18: #{expansive_block_forward.8} parent=11 // pred_check_branch
        %168 = sbr.rel (%p166) target = $region20
      $region19: #{expansive_block_forward.8} parent=11 // pred_region
        _
      $region20: #{expansive_block_forward.8} parent=11 // pred_fallthru
        _
    $region12: #{expansive_block_forward.8} parent=5 // pred_fallthru
      _
    %p169 = scmp.lt.s32.totalorder %s12, 2
    // Predicated region
    $region21: #{expansive_block_forward.8} parent=5 // pred_check
      %p170 = pneg %p169
    $region22: #{expansive_block_forward.8} parent=5 // pred_check_branch
      %172 = sbr.rel (%p170) target = $region24
    $region23: #{expansive_block_forward.8} parent=5 // pred_region
      // Predicated region
      $region25: #{expansive_block_forward.8} parent=23 // pred_check
        %p173 = pneg %p32
      $region26: #{expansive_block_forward.8} parent=23 // pred_check_branch
        %175 = sbr.rel (%p173) target = $region28
      $region27: #{expansive_block_forward.8} parent=23 // pred_region
        %s176 = smul.u32 32, %s12
        %p177 = scmp.lt.s32.totalorder %s176, 63
        %s178 = scalar_select %p177, %s176, 63
        %s179 = smul.addr %s178, 4
        %s180 = scalar_lea.vmem %s0, %s179
        %s181 = smul.u32 32, %s12
      $region28: #{expansive_block_forward.8} parent=23 // pred_fallthru
        _
    $region24: #{expansive_block_forward.8} parent=5 // pred_fallthru
      _
    %p182 = scmp.le.s32.totalorder 1, %s12
    %p183 = scmp.lt.s32.totalorder %s12, 3
    %p184 = pnand %p182, %p183
    %p185 = pneg %p184
    // Predicated region
    $region29: #{expansive_block_forward.8} parent=5 // pred_check
      _
    $region30: #{expansive_block_forward.8} parent=5 // pred_check_branch
      %187 = sbr.rel (%p184) target = $region32
    $region31: #{expansive_block_forward.8} parent=5 // pred_region
      %s188 = ssub.s32 %s12, 1
      %s189 = smul.u32 32, %s17
      %p190 = scmp.lt.s32.totalorder %s189, 63
      %s191 = scalar_select %p190, %s189, 63
      %s192 = smul.addr %s191, 4
      %s193 = scalar_lea.vmem %s0, %s192
      %p194 = pneg %p38
      %p195 = pneg %p35
      %p196 = pneg %p59
      %p197 = pneg %p56
      %p198 = pneg %p80
      %p199 = pneg %p77
      %p200 = pneg %p106
      %p201 = pneg %p103
      %s202 = smul.u32 32, %s17
      %p203 = scmp.lt.s32.totalorder %s202, 63
      %s204 = scalar_select %p203, %s202, 63
      %s205 = smul.addr %s204, 8
      %s206 = scalar_lea.vmem %s3, %s205
      %p207 = pneg %p127
      %p208 = pneg %p124
      %p209 = pneg %p148
      %p210 = pneg %p145
      %s211 = smul.u32 32, %s17
      %p212 = scmp.lt.s32.totalorder %s211, 63
      %s213 = scalar_select %p212, %s211, 63
      %s214 = smul.addr %s213, 4
      %s215 = scalar_lea.vmem %s0, %s214
      %s216 = smul.u32 32, %s17
      %s217 = smul.u32 32, %s17
      %p218 = scmp.lt.s32.totalorder %s217, 63
      %s219 = scalar_select %p218, %s217, 63
      %s220 = smul.addr %s219, 8
      %s221 = scalar_lea.vmem %s3, %s220
      %s222 = smul.u32 32, %s17
      %p223 = scmp.eq.s32.totalorder %s17, 0
      // Predicated region
      $region33: #{expansive_block_forward.8} parent=31 // pred_check
        %p224 = pneg %p223
      $region34: #{expansive_block_forward.8} parent=31 // pred_check_branch
        %226 = sbr.rel (%p224) target = $region36
      $region35: #{expansive_block_forward.8} parent=31 // pred_region
        %227 = vst [vmem:[%s4] sm:$0x1] 0.0
        %228 = vst [vmem:[%s5] sm:$0x1] 0.0
      $region36: #{expansive_block_forward.8} parent=31 // pred_fallthru
        _
      %v229 = vld [vmem:[%s215] sm:$0xf]
      %v230 = vld [vmem:[%s215 + $0x4] sm:$0xf]
      %v231 = vld [vmem:[%s215 + $0x8] sm:$0xf]
      %v232 = vld [vmem:[%s215 + $0xc] sm:$0xf]
      %v233 = vld [vmem:[%s215 + $0x10] sm:$0xf]
      %v234 = vld [vmem:[%s215 + $0x14] sm:$0xf]
      %v235 = vld [vmem:[%s215 + $0x18] sm:$0xf]
      %v236 = vld [vmem:[%s215 + $0x1c] sm:$0xf]
      %v237 = vld [vmem:[%s215 + $0x20] sm:$0xf]
      %v238 = vld [vmem:[%s215 + $0x24] sm:$0xf]
      %v239 = vld [vmem:[%s215 + $0x28] sm:$0xf]
      %v240 = vld [vmem:[%s215 + $0x2c] sm:$0xf]
      %v241 = vld [vmem:[%s215 + $0x30] sm:$0xf]
      %v242 = vld [vmem:[%s215 + $0x34] sm:$0xf]
      %v243 = vld [vmem:[%s215 + $0x38] sm:$0xf]
      %v244 = vld [vmem:[%s215 + $0x3c] sm:$0xf]
      %v245 = vld [vmem:[%s215 + $0x40] sm:$0xf]
      %v246 = vld [vmem:[%s215 + $0x44] sm:$0xf]
      %v247 = vld [vmem:[%s215 + $0x48] sm:$0xf]
      %v248 = vld [vmem:[%s215 + $0x4c] sm:$0xf]
      %v249 = vld [vmem:[%s215 + $0x50] sm:$0xf]
      %v250 = vld [vmem:[%s215 + $0x54] sm:$0xf]
      %v251 = vld [vmem:[%s215 + $0x58] sm:$0xf]
      %v252 = vld [vmem:[%s215 + $0x5c] sm:$0xf]
      %v253 = vld [vmem:[%s215 + $0x60] sm:$0xf]
      %v254 = vld [vmem:[%s215 + $0x64] sm:$0xf]
      %v255 = vld [vmem:[%s215 + $0x68] sm:$0xf]
      %v256 = vld [vmem:[%s215 + $0x6c] sm:$0xf]
      %v257 = vld [vmem:[%s215 + $0x70] sm:$0xf]
      %v258 = vld [vmem:[%s215 + $0x74] sm:$0xf]
      %v259 = vld [vmem:[%s215 + $0x78] sm:$0xf]
      %v260 = vld [vmem:[%s215 + $0x7c] sm:$0xf]
      %v261 = vld [vmem:[%s1] sm:$0xf]
      %v262 = vld [vmem:[%s1 + $0x4] sm:$0xf]
      %v263 = vld [vmem:[%s1 + $0x8] sm:$0xf]
      %v264 = vld [vmem:[%s1 + $0xc] sm:$0xf]
      %v265 = vld [vmem:[%s1 + $0x10] sm:$0xf]
      %v266 = vld [vmem:[%s1 + $0x14] sm:$0xf]
      %v267 = vld [vmem:[%s1 + $0x18] sm:$0xf]
      %v268 = vld [vmem:[%s1 + $0x1c] sm:$0xf]
      %v269 = vld [vmem:[%s1 + $0x20] sm:$0xf]
      %v270 = vld [vmem:[%s1 + $0x24] sm:$0xf]
      %v271 = vld [vmem:[%s1 + $0x28] sm:$0xf]
      %v272 = vld [vmem:[%s1 + $0x2c] sm:$0xf]
      %v273 = vld [vmem:[%s1 + $0x30] sm:$0xf]
      %v274 = vld [vmem:[%s1 + $0x34] sm:$0xf]
      %v275 = vld [vmem:[%s1 + $0x38] sm:$0xf]
      %v276 = vld [vmem:[%s1 + $0x3c] sm:$0xf]
      %v277 = vld [vmem:[%s2] sm:$0x1]
      %v279 = vperm.slane %v277, 0
      %v313 = vunpack.c.l.b16 %v229
      %v314 = vunpack.c.l.b16 %v230
      %v315 = vunpack.c.l.b16 %v231
      %v316 = vunpack.c.l.b16 %v232
      %v317 = vunpack.c.l.b16 %v233
      %v318 = vunpack.c.l.b16 %v234
      %v319 = vunpack.c.l.b16 %v235
      %v320 = vunpack.c.l.b16 %v236
      %v321 = vunpack.c.l.b16 %v237
      %v322 = vunpack.c.l.b16 %v238
      %v323 = vunpack.c.l.b16 %v239
      %v324 = vunpack.c.l.b16 %v240
      %v325 = vunpack.c.l.b16 %v241
      %v326 = vunpack.c.l.b16 %v242
      %v327 = vunpack.c.l.b16 %v243
      %v328 = vunpack.c.l.b16 %v244
      %v329 = vunpack.c.l.b16 %v245
      %v330 = vunpack.c.l.b16 %v246
      %v331 = vunpack.c.l.b16 %v247
      %v332 = vunpack.c.l.b16 %v248
      %v333 = vunpack.c.l.b16 %v249
      %v334 = vunpack.c.l.b16 %v250
      %v335 = vunpack.c.l.b16 %v251
      %v336 = vunpack.c.l.b16 %v252
      %v337 = vunpack.c.l.b16 %v253
      %v338 = vunpack.c.l.b16 %v254
      %v339 = vunpack.c.l.b16 %v255
      %v340 = vunpack.c.l.b16 %v256
      %v341 = vunpack.c.l.b16 %v257
      %v342 = vunpack.c.l.b16 %v258
      %v343 = vunpack.c.l.b16 %v259
      %v344 = vunpack.c.l.b16 %v260
      %v345 = vpack.c.b16 %v314, %v313
      %v346 = vpack.c.b16 %v316, %v315
      %v347 = vpack.c.b16 %v318, %v317
      %v348 = vpack.c.b16 %v320, %v319
      %v349 = vpack.c.b16 %v322, %v321
      %v350 = vpack.c.b16 %v324, %v323
      %v351 = vpack.c.b16 %v326, %v325
      %v352 = vpack.c.b16 %v328, %v327
      %v353 = vpack.c.b16 %v330, %v329
      %v354 = vpack.c.b16 %v332, %v331
      %v355 = vpack.c.b16 %v334, %v333
      %v356 = vpack.c.b16 %v336, %v335
      %v357 = vpack.c.b16 %v338, %v337
      %v358 = vpack.c.b16 %v340, %v339
      %v359 = vpack.c.b16 %v342, %v341
      %v360 = vpack.c.b16 %v344, %v343
      %v393 = vunpack.c.l.b16 %v261
      %v394 = vunpack.c.l.b16 %v262
      %v395 = vunpack.c.l.b16 %v263
      %v396 = vunpack.c.l.b16 %v264
      %v397 = vunpack.c.l.b16 %v265
      %v398 = vunpack.c.l.b16 %v266
      %v399 = vunpack.c.l.b16 %v267
      %v400 = vunpack.c.l.b16 %v268
      %v401 = vunpack.c.l.b16 %v269
      %v402 = vunpack.c.l.b16 %v270
      %v403 = vunpack.c.l.b16 %v271
      %v404 = vunpack.c.l.b16 %v272
      %v405 = vunpack.c.l.b16 %v273
      %v406 = vunpack.c.l.b16 %v274
      %v407 = vunpack.c.l.b16 %v275
      %v408 = vunpack.c.l.b16 %v276
      %v409 = vpack.c.b16 %v394, %v393
      %v410 = vpack.c.b16 %v396, %v395
      %v411 = vpack.c.b16 %v398, %v397
      %v412 = vpack.c.b16 %v400, %v399
      %v413 = vpack.c.b16 %v402, %v401
      %v414 = vpack.c.b16 %v404, %v403
      %v415 = vpack.c.b16 %v406, %v405
      %v416 = vpack.c.b16 %v408, %v407
      %425 = vmatpush.bf16.msra.mxu0 %v416
      %426 = vmatpush.bf16.msra.mxu0 %v415
      %427 = vmatpush.bf16.msra.mxu0 %v414
      %428 = vmatpush.bf16.msra.mxu0 %v413
      %429 = vmatpush.bf16.msra.mxu0 %v412
      %430 = vmatpush.bf16.msra.mxu0 %v411
      %431 = vmatpush.bf16.msra.mxu0 %v410
      %432 = vmatpush.bf16.msra.mxu0 %v409
      %433 = vmatmul.bf16.gmra.mxu0 %v345
      %v434 = vpop.f32.mrf.mxu0
      %v435 = vadd.f32 %v279, %v434
      %v436 = vpop.f32.mrf.mxu0
      %v437 = vadd.f32 %v279, %v436
      %438 = vmatmul.bf16.gmra.mxu0 %v346
      %v439 = vpop.f32.mrf.mxu0
      %v440 = vadd.f32 %v279, %v439
      %v441 = vpop.f32.mrf.mxu0
      %v442 = vadd.f32 %v279, %v441
      %443 = vmatmul.bf16.gmra.mxu0 %v347
      %v444 = vpop.f32.mrf.mxu0
      %v445 = vadd.f32 %v279, %v444
      %v446 = vpop.f32.mrf.mxu0
      %v447 = vadd.f32 %v279, %v446
      %448 = vmatmul.bf16.gmra.mxu0 %v348
      %v449 = vpop.f32.mrf.mxu0
      %v450 = vadd.f32 %v279, %v449
      %v451 = vpop.f32.mrf.mxu0
      %v452 = vadd.f32 %v279, %v451
      %453 = vmatmul.bf16.gmra.mxu0 %v349
      %v454 = vpop.f32.mrf.mxu0
      %v455 = vadd.f32 %v279, %v454
      %v456 = vpop.f32.mrf.mxu0
      %v457 = vadd.f32 %v279, %v456
      %458 = vmatmul.bf16.gmra.mxu0 %v350
      %v459 = vpop.f32.mrf.mxu0
      %v460 = vadd.f32 %v279, %v459
      %v461 = vpop.f32.mrf.mxu0
      %v462 = vadd.f32 %v279, %v461
      %463 = vmatmul.bf16.gmra.mxu0 %v351
      %v464 = vpop.f32.mrf.mxu0
      %v465 = vadd.f32 %v279, %v464
      %v466 = vpop.f32.mrf.mxu0
      %v467 = vadd.f32 %v279, %v466
      %468 = vmatmul.bf16.gmra.mxu0 %v352
      %v469 = vpop.f32.mrf.mxu0
      %v470 = vadd.f32 %v279, %v469
      %v471 = vpop.f32.mrf.mxu0
      %v472 = vadd.f32 %v279, %v471
      %473 = vmatmul.bf16.gmra.mxu0 %v353
      %v474 = vpop.f32.mrf.mxu0
      %v475 = vadd.f32 %v279, %v474
      %v476 = vpop.f32.mrf.mxu0
      %v477 = vadd.f32 %v279, %v476
      %478 = vmatmul.bf16.gmra.mxu0 %v354
      %v479 = vpop.f32.mrf.mxu0
      %v480 = vadd.f32 %v279, %v479
      %v481 = vpop.f32.mrf.mxu0
      %v482 = vadd.f32 %v279, %v481
      %483 = vmatmul.bf16.gmra.mxu0 %v355
      %v484 = vpop.f32.mrf.mxu0
      %v485 = vadd.f32 %v279, %v484
      %v486 = vpop.f32.mrf.mxu0
      %v487 = vadd.f32 %v279, %v486
      %488 = vmatmul.bf16.gmra.mxu0 %v356
      %v489 = vpop.f32.mrf.mxu0
      %v490 = vadd.f32 %v279, %v489
      %v491 = vpop.f32.mrf.mxu0
      %v492 = vadd.f32 %v279, %v491
      %493 = vmatmul.bf16.gmra.mxu0 %v357
      %v494 = vpop.f32.mrf.mxu0
      %v495 = vadd.f32 %v279, %v494
      %v496 = vpop.f32.mrf.mxu0
      %v497 = vadd.f32 %v279, %v496
      %498 = vmatmul.bf16.gmra.mxu0 %v358
      %v499 = vpop.f32.mrf.mxu0
      %v500 = vadd.f32 %v279, %v499
      %v501 = vpop.f32.mrf.mxu0
      %v502 = vadd.f32 %v279, %v501
      %503 = vmatmul.bf16.gmra.mxu0 %v359
      %v504 = vpop.f32.mrf.mxu0
      %v505 = vadd.f32 %v279, %v504
      %v506 = vpop.f32.mrf.mxu0
      %v507 = vadd.f32 %v279, %v506
      %508 = vmatmul.bf16.gmra.mxu0 %v360
      %v509 = vpop.f32.mrf.mxu0
      %v510 = vadd.f32 %v279, %v509
      %v511 = vpop.f32.mrf.mxu0
      %v512 = vadd.f32 %v279, %v511
      %513 = vdwg.mxu0
      %v514 = vmax.f32 %v435, 0.0
      %v515 = vmax.f32 %v437, 0.0
      %v516 = vmax.f32 %v440, 0.0
      %v517 = vmax.f32 %v442, 0.0
      %v518 = vmax.f32 %v445, 0.0
      %v519 = vmax.f32 %v447, 0.0
      %v520 = vmax.f32 %v450, 0.0
      %v521 = vmax.f32 %v452, 0.0
      %v522 = vmax.f32 %v455, 0.0
      %v523 = vmax.f32 %v457, 0.0
      %v524 = vmax.f32 %v460, 0.0
      %v525 = vmax.f32 %v462, 0.0
      %v526 = vmax.f32 %v465, 0.0
      %v527 = vmax.f32 %v467, 0.0
      %v528 = vmax.f32 %v470, 0.0
      %v529 = vmax.f32 %v472, 0.0
      %v530 = vmax.f32 %v475, 0.0
      %v531 = vmax.f32 %v477, 0.0
      %v532 = vmax.f32 %v480, 0.0
      %v533 = vmax.f32 %v482, 0.0
      %v534 = vmax.f32 %v485, 0.0
      %v535 = vmax.f32 %v487, 0.0
      %v536 = vmax.f32 %v490, 0.0
      %v537 = vmax.f32 %v492, 0.0
      %v538 = vmax.f32 %v495, 0.0
      %v539 = vmax.f32 %v497, 0.0
      %v540 = vmax.f32 %v500, 0.0
      %v541 = vmax.f32 %v502, 0.0
      %v542 = vmax.f32 %v505, 0.0
      %v543 = vmax.f32 %v507, 0.0
      %v544 = vmax.f32 %v510, 0.0
      %v545 = vmax.f32 %v512, 0.0
      %546 = vst [vmem:[%s221] sm:$0xff] %v514
      %547 = vst [vmem:[%s221 + $0x8] sm:$0xff] %v515
      %548 = vst [vmem:[%s221 + $0x10] sm:$0xff] %v516
      %549 = vst [vmem:[%s221 + $0x18] sm:$0xff] %v517
      %550 = vst [vmem:[%s221 + $0x20] sm:$0xff] %v518
      %551 = vst [vmem:[%s221 + $0x28] sm:$0xff] %v519
      %552 = vst [vmem:[%s221 + $0x30] sm:$0xff] %v520
      %553 = vst [vmem:[%s221 + $0x38] sm:$0xff] %v521
      %554 = vst [vmem:[%s221 + $0x40] sm:$0xff] %v522
      %555 = vst [vmem:[%s221 + $0x48] sm:$0xff] %v523
      %556 = vst [vmem:[%s221 + $0x50] sm:$0xff] %v524
      %557 = vst [vmem:[%s221 + $0x58] sm:$0xff] %v525
      %558 = vst [vmem:[%s221 + $0x60] sm:$0xff] %v526
      %559 = vst [vmem:[%s221 + $0x68] sm:$0xff] %v527
      %560 = vst [vmem:[%s221 + $0x70] sm:$0xff] %v528
      %561 = vst [vmem:[%s221 + $0x78] sm:$0xff] %v529
      %562 = vst [vmem:[%s221 + $0x80] sm:$0xff] %v530
      %563 = vst [vmem:[%s221 + $0x88] sm:$0xff] %v531
      %564 = vst [vmem:[%s221 + $0x90] sm:$0xff] %v532
      %565 = vst [vmem:[%s221 + $0x98] sm:$0xff] %v533
      %566 = vst [vmem:[%s221 + $0xa0] sm:$0xff] %v534
      %567 = vst [vmem:[%s221 + $0xa8] sm:$0xff] %v535
      %568 = vst [vmem:[%s221 + $0xb0] sm:$0xff] %v536
      %569 = vst [vmem:[%s221 + $0xb8] sm:$0xff] %v537
      %570 = vst [vmem:[%s221 + $0xc0] sm:$0xff] %v538
      %571 = vst [vmem:[%s221 + $0xc8] sm:$0xff] %v539
      %572 = vst [vmem:[%s221 + $0xd0] sm:$0xff] %v540
      %573 = vst [vmem:[%s221 + $0xd8] sm:$0xff] %v541
      %574 = vst [vmem:[%s221 + $0xe0] sm:$0xff] %v542
      %575 = vst [vmem:[%s221 + $0xe8] sm:$0xff] %v543
      %576 = vst [vmem:[%s221 + $0xf0] sm:$0xff] %v544
      %577 = vst [vmem:[%s221 + $0xf8] sm:$0xff] %v545
      %s578 = smul.u32 %s17, 256
      %v579 = vlaneseq
      %v580 = vshrl.u32 %v579, 7
      %v581 = vadd.s32 %v580, 8
      %v582 = vadd.s32 %v580, 16
      %v583 = vadd.s32 %v580, 24
      %v584 = vadd.s32 %v580, 32
      %v585 = vadd.s32 %v580, 40
      %v586 = vadd.s32 %v580, 48
      %v587 = vadd.s32 %v580, 56
      %v588 = vadd.s32 %v580, 64
      %v589 = vadd.s32 %v580, 72
      %v590 = vadd.s32 %v580, 80
      %v591 = vadd.s32 %v580, 88
      %v592 = vadd.s32 %v580, 96
      %v593 = vadd.s32 %v580, 104
      %v594 = vadd.s32 %v580, 112
      %v595 = vadd.s32 %v580, 120
      %v596 = vadd.s32 %v580, 128
      %v597 = vadd.s32 %v580, 136
      %v598 = vadd.s32 %v580, 144
      %v599 = vadd.s32 %v580, 152
      %v600 = vadd.s32 %v580, 160
      %v601 = vadd.s32 %v580, 168
      %v602 = vadd.s32 %v580, 176
      %v603 = vadd.s32 %v580, 184
      %v604 = vadd.s32 %v580, 192
      %v605 = vadd.s32 %v580, 200
      %v606 = vadd.s32 %v580, 208
      %v607 = vadd.s32 %v580, 216
      %v608 = vadd.s32 %v580, 224
      %v609 = vadd.s32 %v580, 232
      %v610 = vadd.s32 %v580, 240
      %v611 = vadd.s32 %v580, 248
      %v612 = vstv %s578
      %v613 = vadd.s32 %v612, %v580
      %v614 = vadd.s32 %v612, %v581
      %v615 = vadd.s32 %v612, %v582
      %v616 = vadd.s32 %v612, %v583
      %v617 = vadd.s32 %v612, %v584
      %v618 = vadd.s32 %v612, %v585
      %v619 = vadd.s32 %v612, %v586
      %v620 = vadd.s32 %v612, %v587
      %v621 = vadd.s32 %v612, %v588
      %v622 = vadd.s32 %v612, %v589
      %v623 = vadd.s32 %v612, %v590
      %v624 = vadd.s32 %v612, %v591
      %v625 = vadd.s32 %v612, %v592
      %v626 = vadd.s32 %v612, %v593
      %v627 = vadd.s32 %v612, %v594
      %v628 = vadd.s32 %v612, %v595
      %v629 = vadd.s32 %v612, %v596
      %v630 = vadd.s32 %v612, %v597
      %v631 = vadd.s32 %v612, %v598
      %v632 = vadd.s32 %v612, %v599
      %v633 = vadd.s32 %v612, %v600
      %v634 = vadd.s32 %v612, %v601
      %v635 = vadd.s32 %v612, %v602
      %v636 = vadd.s32 %v612, %v603
      %v637 = vadd.s32 %v612, %v604
      %v638 = vadd.s32 %v612, %v605
      %v639 = vadd.s32 %v612, %v606
      %v640 = vadd.s32 %v612, %v607
      %v641 = vadd.s32 %v612, %v608
      %v642 = vadd.s32 %v612, %v609
      %v643 = vadd.s32 %v612, %v610
      %v644 = vadd.s32 %v612, %v611
      %vm645 = vcmp.lt.s32.totalorder %v613, 288
      %vm646 = vcmp.lt.s32.totalorder %v614, 288
      %vm647 = vcmp.lt.s32.totalorder %v615, 288
      %vm648 = vcmp.lt.s32.totalorder %v616, 288
      %vm649 = vcmp.lt.s32.totalorder %v617, 288
      %vm650 = vcmp.lt.s32.totalorder %v618, 288
      %vm651 = vcmp.lt.s32.totalorder %v619, 288
      %vm652 = vcmp.lt.s32.totalorder %v620, 288
      %vm653 = vcmp.lt.s32.totalorder %v621, 288
      %vm654 = vcmp.lt.s32.totalorder %v622, 288
      %vm655 = vcmp.lt.s32.totalorder %v623, 288
      %vm656 = vcmp.lt.s32.totalorder %v624, 288
      %vm657 = vcmp.lt.s32.totalorder %v625, 288
      %vm658 = vcmp.lt.s32.totalorder %v626, 288
      %vm659 = vcmp.lt.s32.totalorder %v627, 288
      %vm660 = vcmp.lt.s32.totalorder %v628, 288
      %vm661 = vcmp.lt.s32.totalorder %v629, 288
      %vm662 = vcmp.lt.s32.totalorder %v630, 288
      %vm663 = vcmp.lt.s32.totalorder %v631, 288
      %vm664 = vcmp.lt.s32.totalorder %v632, 288
      %vm665 = vcmp.lt.s32.totalorder %v633, 288
      %vm666 = vcmp.lt.s32.totalorder %v634, 288
      %vm667 = vcmp.lt.s32.totalorder %v635, 288
      %vm668 = vcmp.lt.s32.totalorder %v636, 288
      %vm669 = vcmp.lt.s32.totalorder %v637, 288
      %vm670 = vcmp.lt.s32.totalorder %v638, 288
      %vm671 = vcmp.lt.s32.totalorder %v639, 288
      %vm672 = vcmp.lt.s32.totalorder %v640, 288
      %vm673 = vcmp.lt.s32.totalorder %v641, 288
      %vm674 = vcmp.lt.s32.totalorder %v642, 288
      %vm675 = vcmp.lt.s32.totalorder %v643, 288
      %vm676 = vcmp.lt.s32.totalorder %v644, 288
      %v677 = vsel %vm645, 1, 0
      %v678 = vsel %vm646, 1, 0
      %v679 = vsel %vm647, 1, 0
      %v680 = vsel %vm648, 1, 0
      %v681 = vsel %vm649, 1, 0
      %v682 = vsel %vm650, 1, 0
      %v683 = vsel %vm651, 1, 0
      %v684 = vsel %vm652, 1, 0
      %v685 = vsel %vm653, 1, 0
      %v686 = vsel %vm654, 1, 0
      %v687 = vsel %vm655, 1, 0
      %v688 = vsel %vm656, 1, 0
      %v689 = vsel %vm657, 1, 0
      %v690 = vsel %vm658, 1, 0
      %v691 = vsel %vm659, 1, 0
      %v692 = vsel %vm660, 1, 0
      %v693 = vsel %vm661, 1, 0
      %v694 = vsel %vm662, 1, 0
      %v695 = vsel %vm663, 1, 0
      %v696 = vsel %vm664, 1, 0
      %v697 = vsel %vm665, 1, 0
      %v698 = vsel %vm666, 1, 0
      %v699 = vsel %vm667, 1, 0
      %v700 = vsel %vm668, 1, 0
      %v701 = vsel %vm669, 1, 0
      %v702 = vsel %vm670, 1, 0
      %v703 = vsel %vm671, 1, 0
      %v704 = vsel %vm672, 1, 0
      %v705 = vsel %vm673, 1, 0
      %v706 = vsel %vm674, 1, 0
      %v707 = vsel %vm675, 1, 0
      %v708 = vsel %vm676, 1, 0
      %v709 = vcvt.s32.f32 %v677
      %v710 = vcvt.s32.f32 %v678
      %v711 = vcvt.s32.f32 %v679
      %v712 = vcvt.s32.f32 %v680
      %v713 = vcvt.s32.f32 %v681
      %v714 = vcvt.s32.f32 %v682
      %v715 = vcvt.s32.f32 %v683
      %v716 = vcvt.s32.f32 %v684
      %v717 = vcvt.s32.f32 %v685
      %v718 = vcvt.s32.f32 %v686
      %v719 = vcvt.s32.f32 %v687
      %v720 = vcvt.s32.f32 %v688
      %v721 = vcvt.s32.f32 %v689
      %v722 = vcvt.s32.f32 %v690
      %v723 = vcvt.s32.f32 %v691
      %v724 = vcvt.s32.f32 %v692
      %v725 = vcvt.s32.f32 %v693
      %v726 = vcvt.s32.f32 %v694
      %v727 = vcvt.s32.f32 %v695
      %v728 = vcvt.s32.f32 %v696
      %v729 = vcvt.s32.f32 %v697
      %v730 = vcvt.s32.f32 %v698
      %v731 = vcvt.s32.f32 %v699
      %v732 = vcvt.s32.f32 %v700
      %v733 = vcvt.s32.f32 %v701
      %v734 = vcvt.s32.f32 %v702
      %v735 = vcvt.s32.f32 %v703
      %v736 = vcvt.s32.f32 %v704
      %v737 = vcvt.s32.f32 %v705
      %v738 = vcvt.s32.f32 %v706
      %v739 = vcvt.s32.f32 %v707
      %v740 = vcvt.s32.f32 %v708
      %v741 = vmul.f32 %v514, %v709
      %v742 = vmul.f32 %v515, %v710
      %v743 = vmul.f32 %v516, %v711
      %v744 = vmul.f32 %v517, %v712
      %v745 = vmul.f32 %v518, %v713
      %v746 = vmul.f32 %v519, %v714
      %v747 = vmul.f32 %v520, %v715
      %v748 = vmul.f32 %v521, %v716
      %v749 = vmul.f32 %v522, %v717
      %v750 = vmul.f32 %v523, %v718
      %v751 = vmul.f32 %v524, %v719
      %v752 = vmul.f32 %v525, %v720
      %v753 = vmul.f32 %v526, %v721
      %v754 = vmul.f32 %v527, %v722
      %v755 = vmul.f32 %v528, %v723
      %v756 = vmul.f32 %v529, %v724
      %v757 = vmul.f32 %v530, %v725
      %v758 = vmul.f32 %v531, %v726
      %v759 = vmul.f32 %v532, %v727
      %v760 = vmul.f32 %v533, %v728
      %v761 = vmul.f32 %v534, %v729
      %v762 = vmul.f32 %v535, %v730
      %v763 = vmul.f32 %v536, %v731
      %v764 = vmul.f32 %v537, %v732
      %v765 = vmul.f32 %v538, %v733
      %v766 = vmul.f32 %v539, %v734
      %v767 = vmul.f32 %v540, %v735
      %v768 = vmul.f32 %v541, %v736
      %v769 = vmul.f32 %v542, %v737
      %v770 = vmul.f32 %v543, %v738
      %v771 = vmul.f32 %v544, %v739
      %v772 = vmul.f32 %v545, %v740
      %v773 = vld [vmem:[%s4] sm:$0x1]
      %v774 = vadd.f32 %v741, %v742
      %v775 = vadd.f32 %v774, %v743
      %v776 = vadd.f32 %v775, %v744
      %v777 = vadd.f32 %v776, %v745
      %v778 = vadd.f32 %v777, %v746
      %v779 = vadd.f32 %v778, %v747
      %v780 = vadd.f32 %v779, %v748
      %v781 = vadd.f32 %v780, %v749
      %v782 = vadd.f32 %v781, %v750
      %v783 = vadd.f32 %v782, %v751
      %v784 = vadd.f32 %v783, %v752
      %v785 = vadd.f32 %v784, %v753
      %v786 = vadd.f32 %v785, %v754
      %v787 = vadd.f32 %v786, %v755
      %v788 = vadd.f32 %v787, %v756
      %v789 = vadd.f32 %v788, %v757
      %v790 = vadd.f32 %v789, %v758
      %v791 = vadd.f32 %v790, %v759
      %v792 = vadd.f32 %v791, %v760
      %v793 = vadd.f32 %v792, %v761
      %v794 = vadd.f32 %v793, %v762
      %v795 = vadd.f32 %v794, %v763
      %v796 = vadd.f32 %v795, %v764
      %v797 = vadd.f32 %v796, %v765
      %v798 = vadd.f32 %v797, %v766
      %v799 = vadd.f32 %v798, %v767
      %v800 = vadd.f32 %v799, %v768
      %v801 = vadd.f32 %v800, %v769
      %v802 = vadd.f32 %v801, %v770
      %v803 = vadd.f32 %v802, %v771
      %v804 = vadd.f32 %v803, %v772
      %v805 = vrot.slane %v804, 4
      %v806 = vadd.f32 %v804, %v805
      %v807 = vrot.slane %v806, 2
      %v808 = vadd.f32 %v806, %v807
      %v809 = vrot.slane %v808, 1
      %v810 = vadd.f32 %v808, %v809
      %v811 = vadd.f32 %v773, %v810
      %812 = vst [vmem:[%s4] sm:$0x1] %v811
      %v813 = vld [vmem:[%s5] sm:$0x1]
      %v814 = vmul.f32 %v741, %v741
      %v815 = vmul.f32 %v742, %v742
      %v816 = vmul.f32 %v743, %v743
      %v817 = vmul.f32 %v744, %v744
      %v818 = vmul.f32 %v745, %v745
      %v819 = vmul.f32 %v746, %v746
      %v820 = vmul.f32 %v747, %v747
      %v821 = vmul.f32 %v748, %v748
      %v822 = vmul.f32 %v749, %v749
      %v823 = vmul.f32 %v750, %v750
      %v824 = vmul.f32 %v751, %v751
      %v825 = vmul.f32 %v752, %v752
      %v826 = vmul.f32 %v753, %v753
      %v827 = vmul.f32 %v754, %v754
      %v828 = vmul.f32 %v755, %v755
      %v829 = vmul.f32 %v756, %v756
      %v830 = vmul.f32 %v757, %v757
      %v831 = vmul.f32 %v758, %v758
      %v832 = vmul.f32 %v759, %v759
      %v833 = vmul.f32 %v760, %v760
      %v834 = vmul.f32 %v761, %v761
      %v835 = vmul.f32 %v762, %v762
      %v836 = vmul.f32 %v763, %v763
      %v837 = vmul.f32 %v764, %v764
      %v838 = vmul.f32 %v765, %v765
      %v839 = vmul.f32 %v766, %v766
      %v840 = vmul.f32 %v767, %v767
      %v841 = vmul.f32 %v768, %v768
      %v842 = vmul.f32 %v769, %v769
      %v843 = vmul.f32 %v770, %v770
      %v844 = vmul.f32 %v771, %v771
      %v845 = vmul.f32 %v772, %v772
      %v846 = vadd.f32 %v814, %v815
      %v847 = vadd.f32 %v846, %v816
      %v848 = vadd.f32 %v847, %v817
      %v849 = vadd.f32 %v848, %v818
      %v850 = vadd.f32 %v849, %v819
      %v851 = vadd.f32 %v850, %v820
      %v852 = vadd.f32 %v851, %v821
      %v853 = vadd.f32 %v852, %v822
      %v854 = vadd.f32 %v853, %v823
      %v855 = vadd.f32 %v854, %v824
      %v856 = vadd.f32 %v855, %v825
      %v857 = vadd.f32 %v856, %v826
      %v858 = vadd.f32 %v857, %v827
      %v859 = vadd.f32 %v858, %v828
      %v860 = vadd.f32 %v859, %v829
      %v861 = vadd.f32 %v860, %v830
      %v862 = vadd.f32 %v861, %v831
      %v863 = vadd.f32 %v862, %v832
      %v864 = vadd.f32 %v863, %v833
      %v865 = vadd.f32 %v864, %v834
      %v866 = vadd.f32 %v865, %v835
      %v867 = vadd.f32 %v866, %v836
      %v868 = vadd.f32 %v867, %v837
      %v869 = vadd.f32 %v868, %v838
      %v870 = vadd.f32 %v869, %v839
      %v871 = vadd.f32 %v870, %v840
      %v872 = vadd.f32 %v871, %v841
      %v873 = vadd.f32 %v872, %v842
      %v874 = vadd.f32 %v873, %v843
      %v875 = vadd.f32 %v874, %v844
      %v876 = vadd.f32 %v875, %v845
      %v877 = vrot.slane %v876, 4
      %v878 = vadd.f32 %v876, %v877
      %v879 = vrot.slane %v878, 2
      %v880 = vadd.f32 %v878, %v879
      %v881 = vrot.slane %v880, 1
      %v882 = vadd.f32 %v880, %v881
      %v883 = vadd.f32 %v813, %v882
      %884 = vst [vmem:[%s5] sm:$0x1] %v883
      %s885 = smul.u32 32, %s17
      %p886 = scmp.lt.s32.totalorder %s885, 63
      %s887 = scalar_select %p886, %s885, 63
      %s888 = smul.addr %s887, 8
      %s889 = scalar_lea.vmem %s3, %s888
      // Predicated region
      $region37: #{expansive_block_forward.8} parent=31 // pred_check
        %p890 = pneg %p103
      $region38: #{expansive_block_forward.8} parent=31 // pred_check_branch
        %892 = sbr.rel (%p890) target = $region40
      $region39: #{expansive_block_forward.8} parent=31 // pred_region
        %s893 = smul.u32 32, %s17
      $region40: #{expansive_block_forward.8} parent=31 // pred_fallthru
        _
      // Predicated region
      $region41: #{expansive_block_forward.8} parent=31 // pred_check
        %p894 = pneg %p124
      $region42: #{expansive_block_forward.8} parent=31 // pred_check_branch
        %896 = sbr.rel (%p894) target = $region44
      $region43: #{expansive_block_forward.8} parent=31 // pred_region
        _
      $region44: #{expansive_block_forward.8} parent=31 // pred_fallthru
        _
      // Predicated region
      $region45: #{expansive_block_forward.8} parent=31 // pred_check
        %p897 = pneg %p145
      $region46: #{expansive_block_forward.8} parent=31 // pred_check_branch
        %899 = sbr.rel (%p897) target = $region48
      $region47: #{expansive_block_forward.8} parent=31 // pred_region
        _
      $region48: #{expansive_block_forward.8} parent=31 // pred_fallthru
        _
      // Predicated region
      $region49: #{expansive_block_forward.8} parent=31 // pred_check
        %p900 = pneg %p124
      $region50: #{expansive_block_forward.8} parent=31 // pred_check_branch
        %902 = sbr.rel (%p900) target = $region52
      $region51: #{expansive_block_forward.8} parent=31 // pred_region
        _
      $region52: #{expansive_block_forward.8} parent=31 // pred_fallthru
        _
      // Predicated region
      $region53: #{expansive_block_forward.8} parent=31 // pred_check
        %p903 = pneg %p145
      $region54: #{expansive_block_forward.8} parent=31 // pred_check_branch
        %905 = sbr.rel (%p903) target = $region56
      $region55: #{expansive_block_forward.8} parent=31 // pred_region
        _
      $region56: #{expansive_block_forward.8} parent=31 // pred_fallthru
        _
    $region32: #{expansive_block_forward.8} parent=5 // pred_fallthru
      _
    %p906 = scmp.le.s32.totalorder 2, %s12
    // Predicated region
    $region57: #{expansive_block_forward.8} parent=5 // pred_check
      %p907 = pneg %p906
    $region58: #{expansive_block_forward.8} parent=5 // pred_check_branch
      %909 = sbr.rel (%p907) target = $region60
    $region59: #{expansive_block_forward.8} parent=5 // pred_region
      %s910 = ssub.s32 %s12, 2
      // Predicated region
      $region61: #{expansive_block_forward.8} parent=59 // pred_check
        %p911 = pneg %p109
      $region62: #{expansive_block_forward.8} parent=59 // pred_check_branch
        %913 = sbr.rel (%p911) target = $region64
      $region63: #{expansive_block_forward.8} parent=59 // pred_region
        %s914 = smul.u32 32, %s18
        %p915 = scmp.lt.s32.totalorder %s914, 63
        %s916 = scalar_select %p915, %s914, 63
        %s917 = smul.addr %s916, 8
        %s918 = scalar_lea.vmem %s3, %s917
      $region64: #{expansive_block_forward.8} parent=59 // pred_fallthru
        _
    $region60: #{expansive_block_forward.8} parent=5 // pred_fallthru
      _
  $region6: #{expansive_block_forward.8} parent=0 // loop_footer
    %s16 = sadd.s32 1, %s12
  $region7: #{expansive_block_forward.8} parent=0 // loop_footer_branch
    %11 = sbr.rel target = $region3
  $region8: #{expansive_block_forward.8} parent=0 // loop_exit
    _

</llo_original>
